<compile_context>
chip_gen: v6e
topology: v6e:2x2x1
jax: 0.10.0
libtpu: 0.0.40
codegen_flags: <defaults>
</compile_context>

<pallas_src>
import functools

import jax
import jax.numpy as jnp
from jax.experimental import pallas as pl
from jax.experimental.pallas import tpu as pltpu


# ---------------------------------------------------------------------------
# small helpers
# ---------------------------------------------------------------------------
def _round_up(x: int, m: int) -> int:
    return ((x + m - 1) // m) * m


def _pick_row_tile(rows: int, cols: int, itemsize: int = 4,
                   max_bytes: int = 1 << 20) -> int:
    """Largest row tile (multiple of 8, capped at 256) keeping one (tile, cols)
    block under ~1 MiB, so double-buffered in+out tiles fit the scoped-VMEM
    defaults of every TPU generation (16 MiB v5e, 32 MiB v6e/v7x)."""
    cap = max(8, min(256, (max_bytes // (cols * itemsize)) // 8 * 8))
    return min(cap, _round_up(max(rows, 1), 8))


# ---------------------------------------------------------------------------
# Pallas kernel 1: tiled MXU matmul with f32 accumulator
# ---------------------------------------------------------------------------
def _matmul_kernel(a_ref, b_ref, o_ref, acc_ref):
    @pl.when(pl.program_id(2) == 0)
    def _():
        acc_ref[...] = jnp.zeros_like(acc_ref)

    acc_ref[...] += jnp.dot(a_ref[...], b_ref[...],
                            preferred_element_type=jnp.float32)
    o_ref[...] = acc_ref[...].astype(o_ref.dtype)


def pallas_matmul(a, b, *, tm=128, tn=128, tk=128):
    m, k = a.shape
    k2, n = b.shape
    assert k == k2
    mp, kp, np_ = _round_up(m, tm), _round_up(k, tk), _round_up(n, tn)
    a_p = jnp.pad(a, ((0, mp - m), (0, kp - k)))
    b_p = jnp.pad(b, ((0, kp - k), (0, np_ - n)))
    out = pl.pallas_call(
        _matmul_kernel,
        out_shape=jax.ShapeDtypeStruct((mp, np_), jnp.float32),
        grid=(mp // tm, np_ // tn, kp // tk),
        in_specs=[pl.BlockSpec((tm, tk), lambda i, j, l: (i, l)),
                  pl.BlockSpec((tk, tn), lambda i, j, l: (l, j))],
        out_specs=pl.BlockSpec((tm, tn), lambda i, j, l: (i, j)),
        scratch_shapes=[pltpu.VMEM((tm, tn), jnp.float32)],
        compiler_params=pltpu.CompilerParams(
            dimension_semantics=("parallel", "parallel", "arbitrary")),
    )(a_p, b_p)
    return out[:m, :n]


# ---------------------------------------------------------------------------
# Pallas kernel 2: fused BatchNorm affine (+ optional ReLU), NCHW -> (N*C, H*W)
# ---------------------------------------------------------------------------
def _bn_affine_kernel(x_ref, scale_ref, shift_ref, o_ref, *, relu):
    y = x_ref[...] * scale_ref[...] + shift_ref[...]
    if relu:
        y = jnp.maximum(y, 0.0)
    o_ref[...] = y


def batchnorm2d(x, bn_params, *, bn_eps=1e-5, relu=False):
    gamma, beta, mean, var = bn_params
    n, c, h, w = x.shape
    scale = gamma / jnp.sqrt(var + bn_eps)            # (C,) — tiny, plain JAX
    shift = beta - mean * scale
    rows, cols = n * c, h * w
    cols_p = _round_up(cols, 128)                     # lane-dense stores
    tm = _pick_row_tile(rows, cols_p)
    rows_p = _round_up(rows, tm)
    x2 = jnp.pad(x.reshape(rows, cols),
                 ((0, rows_p - rows), (0, cols_p - cols)))
    sc_rows = jnp.pad(jnp.tile(scale, n), (0, rows_p - rows)).reshape(rows_p, 1)
    sh_rows = jnp.pad(jnp.tile(shift, n), (0, rows_p - rows)).reshape(rows_p, 1)
    out = pl.pallas_call(
        functools.partial(_bn_affine_kernel, relu=relu),
        out_shape=jax.ShapeDtypeStruct((rows_p, cols_p), x.dtype),
        grid=(rows_p // tm,),
        in_specs=[pl.BlockSpec((tm, cols_p), lambda i: (i, 0)),
                  pl.BlockSpec((tm, 1), lambda i: (i, 0)),
                  pl.BlockSpec((tm, 1), lambda i: (i, 0))],
        out_specs=pl.BlockSpec((tm, cols_p), lambda i: (i, 0)),
        compiler_params=pltpu.CompilerParams(
            dimension_semantics=("parallel",)),
    )(x2, sc_rows, sh_rows)
    return out[:rows, :cols].reshape(n, c, h, w)


# ---------------------------------------------------------------------------
# Pallas kernels 3: tiled, lane-dense elementwise ops (flattened to (R, 512))
# ---------------------------------------------------------------------------
_EW_COLS = 512


def _mul_kernel(x_ref, y_ref, o_ref):
    o_ref[...] = x_ref[...] * y_ref[...]


def _add_kernel(x_ref, y_ref, o_ref):
    o_ref[...] = x_ref[...] + y_ref[...]


def _div_eps_kernel(r_ref, z_ref, o_ref, *, eps):
    o_ref[...] = r_ref[...] / (z_ref[...] + eps)


def _ratio_split_kernel(m_ref, s_ref, r_ref, rm_ref, rs_ref):
    am = jnp.abs(m_ref[...])
    asc = jnp.abs(s_ref[...])
    ratio = am / (am + asc)
    r = r_ref[...]
    rm_ref[...] = ratio * r
    rs_ref[...] = (1.0 - ratio) * r


def _ew_call(kernel, arrs, num_out):
    orig_shape, dtype, n = arrs[0].shape, arrs[0].dtype, arrs[0].size
    rows = pl.cdiv(n, _EW_COLS)
    tm = _pick_row_tile(rows, _EW_COLS)
    rows_p = _round_up(max(rows, 1), tm)
    padded = [jnp.pad(x.reshape(-1), (0, rows_p * _EW_COLS - n))
              .reshape(rows_p, _EW_COLS) for x in arrs]
    block = pl.BlockSpec((tm, _EW_COLS), lambda i: (i, 0))
    out_shape = tuple(jax.ShapeDtypeStruct((rows_p, _EW_COLS), dtype)
                      for _ in range(num_out))
    out_specs = tuple(pl.BlockSpec((tm, _EW_COLS), lambda i: (i, 0))
                      for _ in range(num_out))
    if num_out == 1:
        out_shape, out_specs = out_shape[0], out_specs[0]
    res = pl.pallas_call(
        kernel,
        out_shape=out_shape,
        grid=(rows_p // tm,),
        in_specs=[block] * len(arrs),
        out_specs=out_specs,
        compiler_params=pltpu.CompilerParams(
            dimension_semantics=("parallel",)),
    )(*padded)
    if num_out == 1:
        return res.reshape(-1)[:n].reshape(orig_shape)
    return tuple(o.reshape(-1)[:n].reshape(orig_shape) for o in res)


def ew_mul(x, y):
    return _ew_call(_mul_kernel, [x, y], 1)


def ew_add(x, y):
    return _ew_call(_add_kernel, [x, y], 1)


def ew_div_eps(r, z, eps):
    return _ew_call(functools.partial(_div_eps_kernel, eps=eps), [r, z], 1)


def ratio_split(m, sc, r):
    return _ew_call(_ratio_split_kernel, [m, sc, r], 2)


# ---------------------------------------------------------------------------
# Convolution forward / input-gradient via im2col + Pallas matmul
# (patch gather / col2im scatter-add are XLA layout plumbing in the wrapper)
# ---------------------------------------------------------------------------
def conv2d_forward(x, wt, stride, padding):
    n, cin, h, w = x.shape
    cout, _, kh, kw = wt.shape
    ho = (h + 2 * padding - kh) // stride + 1
    wo = (w + 2 * padding - kw) // stride + 1
    xp = jnp.pad(x, ((0, 0), (0, 0), (padding, padding), (padding, padding)))
    taps = []
    for ih in range(kh):
        for iw in range(kw):
            taps.append(xp[:, :, ih: ih + (ho - 1) * stride + 1: stride,
                                 iw: iw + (wo - 1) * stride + 1: stride])
    patches = jnp.stack(taps, axis=0).reshape(kh, kw, n, cin, ho, wo)
    patches = patches.transpose(2, 4, 5, 3, 0, 1).reshape(n * ho * wo,
                                                          cin * kh * kw)
    y = pallas_matmul(patches, wt.reshape(cout, cin * kh * kw).T)
    return y.reshape(n, ho, wo, cout).transpose(0, 3, 1, 2)


def conv2d_input_grad(g, wt, stride, padding, in_hw):
    """Gradient of sum(conv2d(x, wt) * g) w.r.t. x (transposed convolution)."""
    n, cout, ho, wo = g.shape
    _, cin, kh, kw = wt.shape
    h, w = in_hw
    g2 = g.transpose(0, 2, 3, 1).reshape(n * ho * wo, cout)
    cols = pallas_matmul(g2, wt.reshape(cout, cin * kh * kw))
    cols = cols.reshape(n, ho, wo, cin, kh, kw)
    hp, wp = h + 2 * padding, w + 2 * padding
    xg = jnp.zeros((n, cin, hp, wp), cols.dtype)
    for ih in range(kh):
        for iw in range(kw):
            tap = cols[:, :, :, :, ih, iw].transpose(0, 3, 1, 2)
            xg = xg.at[:, :, ih: ih + (ho - 1) * stride + 1: stride,
                             iw: iw + (wo - 1) * stride + 1: stride].add(tap)
    return xg[:, :, padding: padding + h, padding: padding + w]


def lrp_conv2d_zplus(a_in, r_out, wt, stride, padding, eps):
    """RelevancePropagationConv2d (z+ rule): r_in = a * conv_T(r / (conv(a,w+)+eps), w+)."""
    wp = jnp.maximum(wt, 0.0)
    z = conv2d_forward(a_in, wp, stride, padding)
    s = ew_div_eps(r_out, z, eps)
    c = conv2d_input_grad(s, wp, stride, padding, a_in.shape[2:])
    return ew_mul(a_in, c)


# ---------------------------------------------------------------------------
# RelevancePropagationBottleneck.forward(a, r)
# ---------------------------------------------------------------------------
def relevance_propagation_bottleneck(a, r, params, *, stride, eps=1e-5,
                                     bn_eps=1e-5):
    w1, w2, w3 = params["w1"], params["w2"], params["w3"]
    wd = params.get("wd")

    # Forward pass with original weights. Only the conv inputs (a, h1, h2) and
    # the block outputs are needed; BN / ReLU LRP steps are identities and are
    # elided entirely (no copy kernel, no DMA of unused activations).
    h1 = batchnorm2d(conv2d_forward(a, w1, 1, 0), params["bn1"],
                     bn_eps=bn_eps, relu=True)
    h2 = batchnorm2d(conv2d_forward(h1, w2, stride, 1), params["bn2"],
                     bn_eps=bn_eps, relu=True)
    mainstream = batchnorm2d(conv2d_forward(h2, w3, 1, 0), params["bn3"],
                             bn_eps=bn_eps)

    if wd is not None:
        shortcut = batchnorm2d(conv2d_forward(a, wd, stride, 0), params["bnd"],
                               bn_eps=bn_eps)
        r_main, r_short = ratio_split(mainstream, shortcut, r)
    else:  # no downsample: ratio == 1 everywhere
        r_main, r_short = r, jnp.zeros_like(r)

    # Mainstream backward (bn3 / relu / bn2 / relu / bn1 pass relevance through).
    r_main = lrp_conv2d_zplus(h2, r_main, w3, 1, 0, eps)        # conv3
    r_main = lrp_conv2d_zplus(h1, r_main, w2, stride, 1, eps)   # conv2
    r_main = lrp_conv2d_zplus(a, r_main, w1, 1, 0, eps)         # conv1
    # Shortcut backward (downsample conv only; its BN is not used here).
    if wd is not None:
        r_short = lrp_conv2d_zplus(a, r_short, wd, stride, 0, eps)
    return ew_add(r_main, r_short)


# ---------------------------------------------------------------------------
# Pure-JAX reference (mirrors the PyTorch module) for correctness checking
# ---------------------------------------------------------------------------
def _ref_bottleneck(a, r, params, *, stride, eps=1e-5, bn_eps=1e-5):
    def conv(x, wt, s, pad):
        return jax.lax.conv_general_dilated(
            x, wt, (s, s), ((pad, pad), (pad, pad)),
            dimension_numbers=("NCHW", "OIHW", "NCHW"),
            precision=jax.lax.Precision.HIGHEST)

    def bn(x, prm, relu=False):
        g, b, mu, v = prm
        y = (x - mu[None, :, None, None]) * (
            g / jnp.sqrt(v + bn_eps))[None, :, None, None] + b[None, :, None, None]
        return jnp.maximum(y, 0.0) if relu else y

    def lrp_conv(a_in, r_out, wt, s, pad):
        wp = jnp.maximum(wt, 0.0)
        f = lambda x: conv(x, wp, s, pad)
        z = f(a_in) + eps
        c = jax.vjp(f, a_in)[1](r_out / z)[0]
        return a_in * c

    h1 = bn(conv(a, params["w1"], 1, 0), params["bn1"], relu=True)
    h2 = bn(conv(h1, params["w2"], stride, 1), params["bn2"], relu=True)
    m = bn(conv(h2, params["w3"], 1, 0), params["bn3"])
    sc = bn(conv(a, params["wd"], stride, 0), params["bnd"])
    ratio = jnp.abs(m) / (jnp.abs(m) + jnp.abs(sc))
    r_main, r_short = ratio * r, (1.0 - ratio) * r
    r_main = lrp_conv(h2, r_main, params["w3"], 1, 0)
    r_main = lrp_conv(h1, r_main, params["w2"], stride, 1)
    r_main = lrp_conv(a, r_main, params["w1"], 1, 0)
    r_short = lrp_conv(a, r_short, params["wd"], stride, 0)
    return r_main + r_short


if __name__ == "__main__":
    key = jax.random.PRNGKey(0)
    ks = jax.random.split(key, 24)

    # Small ResNet Bottleneck with downsample:
    #   input 8 channels @ 16x16, width 4, expansion 4 -> output 16 ch @ 8x8.
    N, CIN, H, W = 2, 8, 16, 16
    WIDTH, COUT, STRIDE = 4, 16, 2

    def bn_init(i, c):
        return (1.0 + 0.1 * jax.random.normal(ks[i], (c,), jnp.float32),
                0.1 * jax.random.normal(ks[i + 1], (c,), jnp.float32),
                0.1 * jax.random.normal(ks[i + 2], (c,), jnp.float32),
                0.5 + jax.random.uniform(ks[i + 3], (c,), jnp.float32))

    params = {
        "w1": 0.3 * jax.random.normal(ks[0], (WIDTH, CIN, 1, 1), jnp.float32),
        "w2": 0.3 * jax.random.normal(ks[1], (WIDTH, WIDTH, 3, 3), jnp.float32),
        "w3": 0.3 * jax.random.normal(ks[2], (COUT, WIDTH, 1, 1), jnp.float32),
        "wd": 0.3 * jax.random.normal(ks[3], (COUT, CIN, 1, 1), jnp.float32),
        "bn1": bn_init(4, WIDTH),
        "bn2": bn_init(8, WIDTH),
        "bn3": bn_init(12, COUT),
        "bnd": bn_init(16, COUT),
    }
    # Bottleneck inputs in a ResNet are post-ReLU, hence non-negative.
    a = jax.random.uniform(ks[20], (N, CIN, H, W), jnp.float32)
    r = jax.random.normal(ks[21], (N, COUT, H // STRIDE, W // STRIDE),
                          jnp.float32)

    lrp_fn = jax.jit(functools.partial(relevance_propagation_bottleneck,
                                       stride=STRIDE, eps=1e-5, bn_eps=1e-5))
    out = jax.block_until_ready(lrp_fn(a, r, params))
    ref = jax.block_until_ready(
        _ref_bottleneck(a, r, params, stride=STRIDE, eps=1e-5, bn_eps=1e-5))

    assert out.shape == a.shape and out.dtype == a.dtype
    assert bool(jnp.all(jnp.isfinite(out)))
    rel_err = float(jnp.max(jnp.abs(out - ref)) / (jnp.max(jnp.abs(ref)) + 1e-6))
    assert rel_err < 2e-3, f"mismatch vs reference: rel_err={rel_err}"
    print("KERNEL_OK")
</pallas_src>

<mosaic_0001>
module attributes {stable_mosaic.version = 11 : i64} {
  func.func @_matmul_kernel(%arg0: i32, %arg1: i32, %arg2: i32, %arg3: memref<128x128xf32, #tpu.memory_space<vmem>>, %arg4: memref<128x128xf32, #tpu.memory_space<vmem>>, %arg5: memref<128x128xf32, #tpu.memory_space<vmem>>, %arg6: memref<128x128xf32, #tpu.memory_space<vmem>>) attributes {dimension_semantics = [#tpu.dimension_semantics<parallel>, #tpu.dimension_semantics<parallel>, #tpu.dimension_semantics<arbitrary>], iteration_bounds = array<i64: 4, 1, 1>, scalar_prefetch = 0 : i64, scratch_operands = 1 : i64, tpu.core_type = #tpu.core_type<tc>, window_params = [{transform_indices = @transform_0, window_bounds = array<i64: 128, 128>}, {transform_indices = @transform_1, window_bounds = array<i64: 128, 128>}, {transform_indices = @transform_2, window_bounds = array<i64: 128, 128>}]} {
    %c0_i32 = arith.constant 0 : i32
    %0 = arith.cmpi eq, %arg2, %c0_i32 : i32
    %1 = arith.extui %0 : i1 to i32
    %c0_i32_0 = arith.constant 0 : i32
    %2 = arith.cmpi ne, %1, %c0_i32_0 : i32
    scf.if %2 {
      %cst_12 = arith.constant 0.000000e+00 : f32
      %11 = vector.broadcast %cst_12 : f32 to vector<128x128xf32>
      %c0_13 = arith.constant 0 : index
      %c0_14 = arith.constant 0 : index
      %12 = vector.load %arg6[%c0_13, %c0_14] : memref<128x128xf32, #tpu.memory_space<vmem>>, vector<128x128xf32>
      tpu.vector_store %arg6[%c0_13, %c0_14], %11 {strides = array<i32>} : memref<128x128xf32, #tpu.memory_space<vmem>>, vector<128x128xf32>,
    } else {
    }
    %c0 = arith.constant 0 : index
    %c0_1 = arith.constant 0 : index
    %3 = vector.load %arg6[%c0, %c0_1] : memref<128x128xf32, #tpu.memory_space<vmem>>, vector<128x128xf32>
    %c0_2 = arith.constant 0 : index
    %c0_3 = arith.constant 0 : index
    %4 = vector.load %arg3[%c0_2, %c0_3] : memref<128x128xf32, #tpu.memory_space<vmem>>, vector<128x128xf32>
    %c0_4 = arith.constant 0 : index
    %c0_5 = arith.constant 0 : index
    %5 = vector.load %arg4[%c0_4, %c0_5] : memref<128x128xf32, #tpu.memory_space<vmem>>, vector<128x128xf32>
    %cst = arith.constant dense<0.000000e+00> : vector<128x128xf32>
    %6 = tpu.matmul %4, %5, %cst {dimension_numbers = #tpu.dot_dimension_numbers<[1], [0], [0], [1], [0, 0, 1, 1], [], []>} : vector<128x128xf32>, vector<128x128xf32>, vector<128x128xf32> -> vector<128x128xf32>
    %7 = arith.addf %3, %6 : vector<128x128xf32>
    %c0_6 = arith.constant 0 : index
    %c0_7 = arith.constant 0 : index
    %8 = vector.load %arg6[%c0_6, %c0_7] : memref<128x128xf32, #tpu.memory_space<vmem>>, vector<128x128xf32>
    tpu.vector_store %arg6[%c0_6, %c0_7], %7 {strides = array<i32>} : memref<128x128xf32, #tpu.memory_space<vmem>>, vector<128x128xf32>,
    %c0_8 = arith.constant 0 : index
    %c0_9 = arith.constant 0 : index
    %9 = vector.load %arg6[%c0_8, %c0_9] : memref<128x128xf32, #tpu.memory_space<vmem>>, vector<128x128xf32>
    %c0_10 = arith.constant 0 : index
    %c0_11 = arith.constant 0 : index
    %10 = vector.load %arg5[%c0_10, %c0_11] : memref<128x128xf32, #tpu.memory_space<vmem>>, vector<128x128xf32>
    tpu.vector_store %arg5[%c0_10, %c0_11], %9 {strides = array<i32>} : memref<128x128xf32, #tpu.memory_space<vmem>>, vector<128x128xf32>,
    return
  }
  func.func @transform_0(%arg0: i32, %arg1: i32, %arg2: i32) -> (i32, i32) {
    %c0_i32 = arith.constant 0 : i32
    return %arg0, %arg2 : i32, i32
  }
  func.func @transform_1(%arg0: i32, %arg1: i32, %arg2: i32) -> (i32, i32) {
    %c0_i32 = arith.constant 0 : i32
    return %arg2, %arg1 : i32, i32
  }
  func.func @transform_2(%arg0: i32, %arg1: i32, %arg2: i32) -> (i32, i32) {
    %c0_i32 = arith.constant 0 : i32
    return %arg0, %arg1 : i32, i32
  }
}

module attributes {stable_mosaic.version = 11 : i64} {
  func.func @_bn_affine_kernel(%arg0: i32, %arg1: memref<8x256xf32, #tpu.memory_space<vmem>>, %arg2: memref<8x1xf32, #tpu.memory_space<vmem>>, %arg3: memref<8x1xf32, #tpu.memory_space<vmem>>, %arg4: memref<8x256xf32, #tpu.memory_space<vmem>>) attributes {dimension_semantics = [#tpu.dimension_semantics<parallel>], iteration_bounds = array<i64: 1>, scalar_prefetch = 0 : i64, scratch_operands = 0 : i64, tpu.core_type = #tpu.core_type<tc>, window_params = [{transform_indices = @transform_0, window_bounds = array<i64: 8, 256>}, {transform_indices = @transform_1, window_bounds = array<i64: 8, 1>}, {transform_indices = @transform_2, window_bounds = array<i64: 8, 1>}, {transform_indices = @transform_3, window_bounds = array<i64: 8, 256>}]} {
    %c0 = arith.constant 0 : index
    %c0_0 = arith.constant 0 : index
    %0 = vector.load %arg1[%c0, %c0_0] : memref<8x256xf32, #tpu.memory_space<vmem>>, vector<8x256xf32>
    %c0_1 = arith.constant 0 : index
    %c0_2 = arith.constant 0 : index
    %1 = vector.load %arg2[%c0_1, %c0_2] : memref<8x1xf32, #tpu.memory_space<vmem>>, vector<8x1xf32>
    %2 = vector.broadcast %1 : vector<8x1xf32> to vector<8x256xf32>
    %3 = arith.mulf %0, %2 : vector<8x256xf32>
    %c0_3 = arith.constant 0 : index
    %c0_4 = arith.constant 0 : index
    %4 = vector.load %arg3[%c0_3, %c0_4] : memref<8x1xf32, #tpu.memory_space<vmem>>, vector<8x1xf32>
    %5 = vector.broadcast %4 : vector<8x1xf32> to vector<8x256xf32>
    %6 = arith.addf %3, %5 : vector<8x256xf32>
    %cst = arith.constant 0.000000e+00 : f32
    %7 = vector.broadcast %cst : f32 to vector<8x256xf32>
    %8 = arith.maximumf %6, %7 : vector<8x256xf32>
    %c0_5 = arith.constant 0 : index
    %c0_6 = arith.constant 0 : index
    %9 = vector.load %arg4[%c0_5, %c0_6] : memref<8x256xf32, #tpu.memory_space<vmem>>, vector<8x256xf32>
    tpu.vector_store %arg4[%c0_5, %c0_6], %8 {strides = array<i32>} : memref<8x256xf32, #tpu.memory_space<vmem>>, vector<8x256xf32>,
    return
  }
  func.func @transform_0(%arg0: i32) -> (i32, i32) {
    %c0_i32 = arith.constant 0 : i32
    %c0_i32_0 = arith.constant 0 : i32
    return %arg0, %c0_i32 : i32, i32
  }
  func.func @transform_1(%arg0: i32) -> (i32, i32) {
    %c0_i32 = arith.constant 0 : i32
    %c0_i32_0 = arith.constant 0 : i32
    return %arg0, %c0_i32 : i32, i32
  }
  func.func @transform_2(%arg0: i32) -> (i32, i32) {
    %c0_i32 = arith.constant 0 : i32
    %c0_i32_0 = arith.constant 0 : i32
    return %arg0, %c0_i32 : i32, i32
  }
  func.func @transform_3(%arg0: i32) -> (i32, i32) {
    %c0_i32 = arith.constant 0 : i32
    %c0_i32_0 = arith.constant 0 : i32
    return %arg0, %c0_i32 : i32, i32
  }
}

module attributes {stable_mosaic.version = 11 : i64} {
  func.func @_bn_affine_kernel(%arg0: i32, %arg1: memref<8x128xf32, #tpu.memory_space<vmem>>, %arg2: memref<8x1xf32, #tpu.memory_space<vmem>>, %arg3: memref<8x1xf32, #tpu.memory_space<vmem>>, %arg4: memref<8x128xf32, #tpu.memory_space<vmem>>) attributes {dimension_semantics = [#tpu.dimension_semantics<parallel>], iteration_bounds = array<i64: 1>, scalar_prefetch = 0 : i64, scratch_operands = 0 : i64, tpu.core_type = #tpu.core_type<tc>, window_params = [{transform_indices = @transform_0, window_bounds = array<i64: 8, 128>}, {transform_indices = @transform_1, window_bounds = array<i64: 8, 1>}, {transform_indices = @transform_2, window_bounds = array<i64: 8, 1>}, {transform_indices = @transform_3, window_bounds = array<i64: 8, 128>}]} {
    %c0 = arith.constant 0 : index
    %c0_0 = arith.constant 0 : index
    %0 = vector.load %arg1[%c0, %c0_0] : memref<8x128xf32, #tpu.memory_space<vmem>>, vector<8x128xf32>
    %c0_1 = arith.constant 0 : index
    %c0_2 = arith.constant 0 : index
    %1 = vector.load %arg2[%c0_1, %c0_2] : memref<8x1xf32, #tpu.memory_space<vmem>>, vector<8x1xf32>
    %2 = vector.broadcast %1 : vector<8x1xf32> to vector<8x128xf32>
    %3 = arith.mulf %0, %2 : vector<8x128xf32>
    %c0_3 = arith.constant 0 : index
    %c0_4 = arith.constant 0 : index
    %4 = vector.load %arg3[%c0_3, %c0_4] : memref<8x1xf32, #tpu.memory_space<vmem>>, vector<8x1xf32>
    %5 = vector.broadcast %4 : vector<8x1xf32> to vector<8x128xf32>
    %6 = arith.addf %3, %5 : vector<8x128xf32>
    %cst = arith.constant 0.000000e+00 : f32
    %7 = vector.broadcast %cst : f32 to vector<8x128xf32>
    %8 = arith.maximumf %6, %7 : vector<8x128xf32>
    %c0_5 = arith.constant 0 : index
    %c0_6 = arith.constant 0 : index
    %9 = vector.load %arg4[%c0_5, %c0_6] : memref<8x128xf32, #tpu.memory_space<vmem>>, vector<8x128xf32>
    tpu.vector_store %arg4[%c0_5, %c0_6], %8 {strides = array<i32>} : memref<8x128xf32, #tpu.memory_space<vmem>>, vector<8x128xf32>,
    return
  }
  func.func @transform_0(%arg0: i32) -> (i32, i32) {
    %c0_i32 = arith.constant 0 : i32
    %c0_i32_0 = arith.constant 0 : i32
    return %arg0, %c0_i32 : i32, i32
  }
  func.func @transform_1(%arg0: i32) -> (i32, i32) {
    %c0_i32 = arith.constant 0 : i32
    %c0_i32_0 = arith.constant 0 : i32
    return %arg0, %c0_i32 : i32, i32
  }
  func.func @transform_2(%arg0: i32) -> (i32, i32) {
    %c0_i32 = arith.constant 0 : i32
    %c0_i32_0 = arith.constant 0 : i32
    return %arg0, %c0_i32 : i32, i32
  }
  func.func @transform_3(%arg0: i32) -> (i32, i32) {
    %c0_i32 = arith.constant 0 : i32
    %c0_i32_0 = arith.constant 0 : i32
    return %arg0, %c0_i32 : i32, i32
  }
}

module attributes {stable_mosaic.version = 11 : i64} {
  func.func @_matmul_kernel(%arg0: i32, %arg1: i32, %arg2: i32, %arg3: memref<128x128xf32, #tpu.memory_space<vmem>>, %arg4: memref<128x128xf32, #tpu.memory_space<vmem>>, %arg5: memref<128x128xf32, #tpu.memory_space<vmem>>, %arg6: memref<128x128xf32, #tpu.memory_space<vmem>>) attributes {dimension_semantics = [#tpu.dimension_semantics<parallel>, #tpu.dimension_semantics<parallel>, #tpu.dimension_semantics<arbitrary>], iteration_bounds = array<i64: 1, 1, 1>, scalar_prefetch = 0 : i64, scratch_operands = 1 : i64, tpu.core_type = #tpu.core_type<tc>, window_params = [{transform_indices = @transform_0, window_bounds = array<i64: 128, 128>}, {transform_indices = @transform_1, window_bounds = array<i64: 128, 128>}, {transform_indices = @transform_2, window_bounds = array<i64: 128, 128>}]} {
    %c0_i32 = arith.constant 0 : i32
    %0 = arith.cmpi eq, %arg2, %c0_i32 : i32
    %1 = arith.extui %0 : i1 to i32
    %c0_i32_0 = arith.constant 0 : i32
    %2 = arith.cmpi ne, %1, %c0_i32_0 : i32
    scf.if %2 {
      %cst_12 = arith.constant 0.000000e+00 : f32
      %11 = vector.broadcast %cst_12 : f32 to vector<128x128xf32>
      %c0_13 = arith.constant 0 : index
      %c0_14 = arith.constant 0 : index
      %12 = vector.load %arg6[%c0_13, %c0_14] : memref<128x128xf32, #tpu.memory_space<vmem>>, vector<128x128xf32>
      tpu.vector_store %arg6[%c0_13, %c0_14], %11 {strides = array<i32>} : memref<128x128xf32, #tpu.memory_space<vmem>>, vector<128x128xf32>,
    } else {
    }
    %c0 = arith.constant 0 : index
    %c0_1 = arith.constant 0 : index
    %3 = vector.load %arg6[%c0, %c0_1] : memref<128x128xf32, #tpu.memory_space<vmem>>, vector<128x128xf32>
    %c0_2 = arith.constant 0 : index
    %c0_3 = arith.constant 0 : index
    %4 = vector.load %arg3[%c0_2, %c0_3] : memref<128x128xf32, #tpu.memory_space<vmem>>, vector<128x128xf32>
    %c0_4 = arith.constant 0 : index
    %c0_5 = arith.constant 0 : index
    %5 = vector.load %arg4[%c0_4, %c0_5] : memref<128x128xf32, #tpu.memory_space<vmem>>, vector<128x128xf32>
    %cst = arith.constant dense<0.000000e+00> : vector<128x128xf32>
    %6 = tpu.matmul %4, %5, %cst {dimension_numbers = #tpu.dot_dimension_numbers<[1], [0], [0], [1], [0, 0, 1, 1], [], []>} : vector<128x128xf32>, vector<128x128xf32>, vector<128x128xf32> -> vector<128x128xf32>
    %7 = arith.addf %3, %6 : vector<128x128xf32>
    %c0_6 = arith.constant 0 : index
    %c0_7 = arith.constant 0 : index
    %8 = vector.load %arg6[%c0_6, %c0_7] : memref<128x128xf32, #tpu.memory_space<vmem>>, vector<128x128xf32>
    tpu.vector_store %arg6[%c0_6, %c0_7], %7 {strides = array<i32>} : memref<128x128xf32, #tpu.memory_space<vmem>>, vector<128x128xf32>,
    %c0_8 = arith.constant 0 : index
    %c0_9 = arith.constant 0 : index
    %9 = vector.load %arg6[%c0_8, %c0_9] : memref<128x128xf32, #tpu.memory_space<vmem>>, vector<128x128xf32>
    %c0_10 = arith.constant 0 : index
    %c0_11 = arith.constant 0 : index
    %10 = vector.load %arg5[%c0_10, %c0_11] : memref<128x128xf32, #tpu.memory_space<vmem>>, vector<128x128xf32>
    tpu.vector_store %arg5[%c0_10, %c0_11], %9 {strides = array<i32>} : memref<128x128xf32, #tpu.memory_space<vmem>>, vector<128x128xf32>,
    return
  }
  func.func @transform_0(%arg0: i32, %arg1: i32, %arg2: i32) -> (i32, i32) {
    %c0_i32 = arith.constant 0 : i32
    return %arg0, %arg2 : i32, i32
  }
  func.func @transform_1(%arg0: i32, %arg1: i32, %arg2: i32) -> (i32, i32) {
    %c0_i32 = arith.constant 0 : i32
    return %arg2, %arg1 : i32, i32
  }
  func.func @transform_2(%arg0: i32, %arg1: i32, %arg2: i32) -> (i32, i32) {
    %c0_i32 = arith.constant 0 : i32
    return %arg0, %arg1 : i32, i32
  }
}

module attributes {stable_mosaic.version = 11 : i64} {
  func.func @_bn_affine_kernel(%arg0: i32, %arg1: memref<32x128xf32, #tpu.memory_space<vmem>>, %arg2: memref<32x1xf32, #tpu.memory_space<vmem>>, %arg3: memref<32x1xf32, #tpu.memory_space<vmem>>, %arg4: memref<32x128xf32, #tpu.memory_space<vmem>>) attributes {dimension_semantics = [#tpu.dimension_semantics<parallel>], iteration_bounds = array<i64: 1>, scalar_prefetch = 0 : i64, scratch_operands = 0 : i64, tpu.core_type = #tpu.core_type<tc>, window_params = [{transform_indices = @transform_0, window_bounds = array<i64: 32, 128>}, {transform_indices = @transform_1, window_bounds = array<i64: 32, 1>}, {transform_indices = @transform_2, window_bounds = array<i64: 32, 1>}, {transform_indices = @transform_3, window_bounds = array<i64: 32, 128>}]} {
    %c0 = arith.constant 0 : index
    %c0_0 = arith.constant 0 : index
    %0 = vector.load %arg1[%c0, %c0_0] : memref<32x128xf32, #tpu.memory_space<vmem>>, vector<32x128xf32>
    %c0_1 = arith.constant 0 : index
    %c0_2 = arith.constant 0 : index
    %1 = vector.load %arg2[%c0_1, %c0_2] : memref<32x1xf32, #tpu.memory_space<vmem>>, vector<32x1xf32>
    %2 = vector.broadcast %1 : vector<32x1xf32> to vector<32x128xf32>
    %3 = arith.mulf %0, %2 : vector<32x128xf32>
    %c0_3 = arith.constant 0 : index
    %c0_4 = arith.constant 0 : index
    %4 = vector.load %arg3[%c0_3, %c0_4] : memref<32x1xf32, #tpu.memory_space<vmem>>, vector<32x1xf32>
    %5 = vector.broadcast %4 : vector<32x1xf32> to vector<32x128xf32>
    %6 = arith.addf %3, %5 : vector<32x128xf32>
    %c0_5 = arith.constant 0 : index
    %c0_6 = arith.constant 0 : index
    %7 = vector.load %arg4[%c0_5, %c0_6] : memref<32x128xf32, #tpu.memory_space<vmem>>, vector<32x128xf32>
    tpu.vector_store %arg4[%c0_5, %c0_6], %6 {strides = array<i32>} : memref<32x128xf32, #tpu.memory_space<vmem>>, vector<32x128xf32>,
    return
  }
  func.func @transform_0(%arg0: i32) -> (i32, i32) {
    %c0_i32 = arith.constant 0 : i32
    %c0_i32_0 = arith.constant 0 : i32
    return %arg0, %c0_i32 : i32, i32
  }
  func.func @transform_1(%arg0: i32) -> (i32, i32) {
    %c0_i32 = arith.constant 0 : i32
    %c0_i32_0 = arith.constant 0 : i32
    return %arg0, %c0_i32 : i32, i32
  }
  func.func @transform_2(%arg0: i32) -> (i32, i32) {
    %c0_i32 = arith.constant 0 : i32
    %c0_i32_0 = arith.constant 0 : i32
    return %arg0, %c0_i32 : i32, i32
  }
  func.func @transform_3(%arg0: i32) -> (i32, i32) {
    %c0_i32 = arith.constant 0 : i32
    %c0_i32_0 = arith.constant 0 : i32
    return %arg0, %c0_i32 : i32, i32
  }
}

module attributes {stable_mosaic.version = 11 : i64} {
  func.func @_ratio_split_kernel(%arg0: i32, %arg1: memref<8x512xf32, #tpu.memory_space<vmem>>, %arg2: memref<8x512xf32, #tpu.memory_space<vmem>>, %arg3: memref<8x512xf32, #tpu.memory_space<vmem>>, %arg4: memref<8x512xf32, #tpu.memory_space<vmem>>, %arg5: memref<8x512xf32, #tpu.memory_space<vmem>>) attributes {dimension_semantics = [#tpu.dimension_semantics<parallel>], iteration_bounds = array<i64: 1>, scalar_prefetch = 0 : i64, scratch_operands = 0 : i64, tpu.core_type = #tpu.core_type<tc>, window_params = [{transform_indices = @transform_0, window_bounds = array<i64: 8, 512>}, {transform_indices = @transform_1, window_bounds = array<i64: 8, 512>}, {transform_indices = @transform_2, window_bounds = array<i64: 8, 512>}, {transform_indices = @transform_3, window_bounds = array<i64: 8, 512>}, {transform_indices = @transform_4, window_bounds = array<i64: 8, 512>}]} {
    %c0 = arith.constant 0 : index
    %c0_0 = arith.constant 0 : index
    %0 = vector.load %arg1[%c0, %c0_0] : memref<8x512xf32, #tpu.memory_space<vmem>>, vector<8x512xf32>
    %1 = math.absf %0 : vector<8x512xf32>
    %c0_1 = arith.constant 0 : index
    %c0_2 = arith.constant 0 : index
    %2 = vector.load %arg2[%c0_1, %c0_2] : memref<8x512xf32, #tpu.memory_space<vmem>>, vector<8x512xf32>
    %3 = math.absf %2 : vector<8x512xf32>
    %4 = arith.addf %1, %3 : vector<8x512xf32>
    %5 = arith.divf %1, %4 : vector<8x512xf32>
    %c0_3 = arith.constant 0 : index
    %c0_4 = arith.constant 0 : index
    %6 = vector.load %arg3[%c0_3, %c0_4] : memref<8x512xf32, #tpu.memory_space<vmem>>, vector<8x512xf32>
    %7 = arith.mulf %5, %6 : vector<8x512xf32>
    %c0_5 = arith.constant 0 : index
    %c0_6 = arith.constant 0 : index
    %8 = vector.load %arg4[%c0_5, %c0_6] : memref<8x512xf32, #tpu.memory_space<vmem>>, vector<8x512xf32>
    tpu.vector_store %arg4[%c0_5, %c0_6], %7 {strides = array<i32>} : memref<8x512xf32, #tpu.memory_space<vmem>>, vector<8x512xf32>,
    %cst = arith.constant 1.000000e+00 : f32
    %9 = vector.broadcast %cst : f32 to vector<8x512xf32>
    %10 = arith.subf %9, %5 : vector<8x512xf32>
    %11 = arith.mulf %10, %6 : vector<8x512xf32>
    %c0_7 = arith.constant 0 : index
    %c0_8 = arith.constant 0 : index
    %12 = vector.load %arg5[%c0_7, %c0_8] : memref<8x512xf32, #tpu.memory_space<vmem>>, vector<8x512xf32>
    tpu.vector_store %arg5[%c0_7, %c0_8], %11 {strides = array<i32>} : memref<8x512xf32, #tpu.memory_space<vmem>>, vector<8x512xf32>,
    return
  }
  func.func @transform_0(%arg0: i32) -> (i32, i32) {
    %c0_i32 = arith.constant 0 : i32
    %c0_i32_0 = arith.constant 0 : i32
    return %arg0, %c0_i32 : i32, i32
  }
  func.func @transform_1(%arg0: i32) -> (i32, i32) {
    %c0_i32 = arith.constant 0 : i32
    %c0_i32_0 = arith.constant 0 : i32
    return %arg0, %c0_i32 : i32, i32
  }
  func.func @transform_2(%arg0: i32) -> (i32, i32) {
    %c0_i32 = arith.constant 0 : i32
    %c0_i32_0 = arith.constant 0 : i32
    return %arg0, %c0_i32 : i32, i32
  }
  func.func @transform_3(%arg0: i32) -> (i32, i32) {
    %c0_i32 = arith.constant 0 : i32
    %c0_i32_0 = arith.constant 0 : i32
    return %arg0, %c0_i32 : i32, i32
  }
  func.func @transform_4(%arg0: i32) -> (i32, i32) {
    %c0_i32 = arith.constant 0 : i32
    %c0_i32_0 = arith.constant 0 : i32
    return %arg0, %c0_i32 : i32, i32
  }
}

module attributes {stable_mosaic.version = 11 : i64} {
  func.func @_div_eps_kernel(%arg0: i32, %arg1: memref<8x512xf32, #tpu.memory_space<vmem>>, %arg2: memref<8x512xf32, #tpu.memory_space<vmem>>, %arg3: memref<8x512xf32, #tpu.memory_space<vmem>>) attributes {dimension_semantics = [#tpu.dimension_semantics<parallel>], iteration_bounds = array<i64: 1>, scalar_prefetch = 0 : i64, scratch_operands = 0 : i64, tpu.core_type = #tpu.core_type<tc>, window_params = [{transform_indices = @transform_0, window_bounds = array<i64: 8, 512>}, {transform_indices = @transform_1, window_bounds = array<i64: 8, 512>}, {transform_indices = @transform_2, window_bounds = array<i64: 8, 512>}]} {
    %c0 = arith.constant 0 : index
    %c0_0 = arith.constant 0 : index
    %0 = vector.load %arg1[%c0, %c0_0] : memref<8x512xf32, #tpu.memory_space<vmem>>, vector<8x512xf32>
    %c0_1 = arith.constant 0 : index
    %c0_2 = arith.constant 0 : index
    %1 = vector.load %arg2[%c0_1, %c0_2] : memref<8x512xf32, #tpu.memory_space<vmem>>, vector<8x512xf32>
    %cst = arith.constant 9.99999974E-6 : f32
    %2 = vector.broadcast %cst : f32 to vector<8x512xf32>
    %3 = arith.addf %1, %2 : vector<8x512xf32>
    %4 = arith.divf %0, %3 : vector<8x512xf32>
    %c0_3 = arith.constant 0 : index
    %c0_4 = arith.constant 0 : index
    %5 = vector.load %arg3[%c0_3, %c0_4] : memref<8x512xf32, #tpu.memory_space<vmem>>, vector<8x512xf32>
    tpu.vector_store %arg3[%c0_3, %c0_4], %4 {strides = array<i32>} : memref<8x512xf32, #tpu.memory_space<vmem>>, vector<8x512xf32>,
    return
  }
  func.func @transform_0(%arg0: i32) -> (i32, i32) {
    %c0_i32 = arith.constant 0 : i32
    %c0_i32_0 = arith.constant 0 : i32
    return %arg0, %c0_i32 : i32, i32
  }
  func.func @transform_1(%arg0: i32) -> (i32, i32) {
    %c0_i32 = arith.constant 0 : i32
    %c0_i32_0 = arith.constant 0 : i32
    return %arg0, %c0_i32 : i32, i32
  }
  func.func @transform_2(%arg0: i32) -> (i32, i32) {
    %c0_i32 = arith.constant 0 : i32
    %c0_i32_0 = arith.constant 0 : i32
    return %arg0, %c0_i32 : i32, i32
  }
}

module attributes {stable_mosaic.version = 11 : i64} {
  func.func @_mul_kernel(%arg0: i32, %arg1: memref<8x512xf32, #tpu.memory_space<vmem>>, %arg2: memref<8x512xf32, #tpu.memory_space<vmem>>, %arg3: memref<8x512xf32, #tpu.memory_space<vmem>>) attributes {dimension_semantics = [#tpu.dimension_semantics<parallel>], iteration_bounds = array<i64: 1>, scalar_prefetch = 0 : i64, scratch_operands = 0 : i64, tpu.core_type = #tpu.core_type<tc>, window_params = [{transform_indices = @transform_0, window_bounds = array<i64: 8, 512>}, {transform_indices = @transform_1, window_bounds = array<i64: 8, 512>}, {transform_indices = @transform_2, window_bounds = array<i64: 8, 512>}]} {
    %c0 = arith.constant 0 : index
    %c0_0 = arith.constant 0 : index
    %0 = vector.load %arg1[%c0, %c0_0] : memref<8x512xf32, #tpu.memory_space<vmem>>, vector<8x512xf32>
    %c0_1 = arith.constant 0 : index
    %c0_2 = arith.constant 0 : index
    %1 = vector.load %arg2[%c0_1, %c0_2] : memref<8x512xf32, #tpu.memory_space<vmem>>, vector<8x512xf32>
    %2 = arith.mulf %0, %1 : vector<8x512xf32>
    %c0_3 = arith.constant 0 : index
    %c0_4 = arith.constant 0 : index
    %3 = vector.load %arg3[%c0_3, %c0_4] : memref<8x512xf32, #tpu.memory_space<vmem>>, vector<8x512xf32>
    tpu.vector_store %arg3[%c0_3, %c0_4], %2 {strides = array<i32>} : memref<8x512xf32, #tpu.memory_space<vmem>>, vector<8x512xf32>,
    return
  }
  func.func @transform_0(%arg0: i32) -> (i32, i32) {
    %c0_i32 = arith.constant 0 : i32
    %c0_i32_0 = arith.constant 0 : i32
    return %arg0, %c0_i32 : i32, i32
  }
  func.func @transform_1(%arg0: i32) -> (i32, i32) {
    %c0_i32 = arith.constant 0 : i32
    %c0_i32_0 = arith.constant 0 : i32
    return %arg0, %c0_i32 : i32, i32
  }
  func.func @transform_2(%arg0: i32) -> (i32, i32) {
    %c0_i32 = arith.constant 0 : i32
    %c0_i32_0 = arith.constant 0 : i32
    return %arg0, %c0_i32 : i32, i32
  }
}

module attributes {stable_mosaic.version = 11 : i64} {
  func.func @_add_kernel(%arg0: i32, %arg1: memref<8x512xf32, #tpu.memory_space<vmem>>, %arg2: memref<8x512xf32, #tpu.memory_space<vmem>>, %arg3: memref<8x512xf32, #tpu.memory_space<vmem>>) attributes {dimension_semantics = [#tpu.dimension_semantics<parallel>], iteration_bounds = array<i64: 1>, scalar_prefetch = 0 : i64, scratch_operands = 0 : i64, tpu.core_type = #tpu.core_type<tc>, window_params = [{transform_indices = @transform_0, window_bounds = array<i64: 8, 512>}, {transform_indices = @transform_1, window_bounds = array<i64: 8, 512>}, {transform_indices = @transform_2, window_bounds = array<i64: 8, 512>}]} {
    %c0 = arith.constant 0 : index
    %c0_0 = arith.constant 0 : index
    %0 = vector.load %arg1[%c0, %c0_0] : memref<8x512xf32, #tpu.memory_space<vmem>>, vector<8x512xf32>
    %c0_1 = arith.constant 0 : index
    %c0_2 = arith.constant 0 : index
    %1 = vector.load %arg2[%c0_1, %c0_2] : memref<8x512xf32, #tpu.memory_space<vmem>>, vector<8x512xf32>
    %2 = arith.addf %0, %1 : vector<8x512xf32>
    %c0_3 = arith.constant 0 : index
    %c0_4 = arith.constant 0 : index
    %3 = vector.load %arg3[%c0_3, %c0_4] : memref<8x512xf32, #tpu.memory_space<vmem>>, vector<8x512xf32>
    tpu.vector_store %arg3[%c0_3, %c0_4], %2 {strides = array<i32>} : memref<8x512xf32, #tpu.memory_space<vmem>>, vector<8x512xf32>,
    return
  }
  func.func @transform_0(%arg0: i32) -> (i32, i32) {
    %c0_i32 = arith.constant 0 : i32
    %c0_i32_0 = arith.constant 0 : i32
    return %arg0, %c0_i32 : i32, i32
  }
  func.func @transform_1(%arg0: i32) -> (i32, i32) {
    %c0_i32 = arith.constant 0 : i32
    %c0_i32_0 = arith.constant 0 : i32
    return %arg0, %c0_i32 : i32, i32
  }
  func.func @transform_2(%arg0: i32) -> (i32, i32) {
    %c0_i32 = arith.constant 0 : i32
    %c0_i32_0 = arith.constant 0 : i32
    return %arg0, %c0_i32 : i32, i32
  }
}

</mosaic_0001>

<llo_original>
// kernel: tile.43
$region0: #{tile.43}
  #allocation0 [shape = 's32[1]{0}', space=sflag, size = 0x4, scoped, tag = 'scoped memory for tile.43']
  %s0 = inlined_call_operand.vmem [shape: f32[4], index: 0, kind: input, shape index: {}]
  %s1 = inlined_call_operand.vmem [shape: f32[2,4], index: 1, kind: output, shape index: {}]
  // Predicated region
  $region2: #{tile.43} parent=0 // pred_check
    _
  $region3: #{tile.43} parent=0 // pred_check_branch
    %3 = sbr.rel (0) target = $region5
  $region4: #{tile.43} parent=0 // pred_region
    _
  $region5: #{tile.43} parent=0 // pred_fallthru
    _
  %v4 = vld [vmem:[%s0] ss:$0 sm:$0xff]
  %5 = vst [vmem:[%s1] sm:$0x3] %v4

// kernel: relevance_propagation_bottleneck.27
$region0: #{relevance_propagation_bottleneck.27}
  #allocation0 [shape = 'u32[]', space=smem, size = 0x4, offset = 0x4, fixed_abs, tag = 'smem constant byte address 0x4 - core index']
  #allocation1 [shape = 'u32[144,128]{1,0:T(1,128)}', space=vmem, size = 0x12000, scoped, tag = 'internal scratch']
  %s0 = inlined_call_operand.vmem [shape: f32[8,256], index: 0, kind: input, shape index: {}]
  %s1 = inlined_call_operand.vmem [shape: f32[8,1], index: 1, kind: input, shape index: {}]
  %s2 = inlined_call_operand.vmem [shape: f32[8,1], index: 2, kind: input, shape index: {}]
  %s3 = inlined_call_operand.vmem [shape: f32[8,256], index: 3, kind: output, shape index: {}]
  %s4 = sld [smem:[#allocation0]]
  $region22: #{relevance_propagation_bottleneck.27} parent=0
    _
  %s6 = ssub.s32 1, %s4
  %s7 = scalar_select 0, %s6, %s4
  // Predicated region
  $region2: #{relevance_propagation_bottleneck.27} parent=0 // pred_check
    _
  $region3: #{relevance_propagation_bottleneck.27} parent=0 // pred_check_branch
    %9 = sbr.rel (0) target = $region5
  $region4: #{relevance_propagation_bottleneck.27} parent=0 // pred_region
    _
  $region5: #{relevance_propagation_bottleneck.27} parent=0 // pred_fallthru
    _
  // Predicated region
  $region6: #{relevance_propagation_bottleneck.27} parent=0 // pred_check
    _
  $region7: #{relevance_propagation_bottleneck.27} parent=0 // pred_check_branch
    %11 = sbr.rel (0) target = $region9
  $region8: #{relevance_propagation_bottleneck.27} parent=0 // pred_region
    _
  $region9: #{relevance_propagation_bottleneck.27} parent=0 // pred_fallthru
    _
  // Predicated region
  $region10: #{relevance_propagation_bottleneck.27} parent=0 // pred_check
    _
  $region11: #{relevance_propagation_bottleneck.27} parent=0 // pred_check_branch
    %13 = sbr.rel (0) target = $region13
  $region12: #{relevance_propagation_bottleneck.27} parent=0 // pred_region
    _
  $region13: #{relevance_propagation_bottleneck.27} parent=0 // pred_fallthru
    _
  %v14 = vld [vmem:[%s0] sm:$0xff]
  %v15 = vld [vmem:[%s0 + $0x8] sm:$0xff]
  %v16 = vld [vmem:[%s1] sm:$0xff]
  %18 = vset.pattern.permute.xlu0 0
  %19 = vperm.xlu0 %18, %v16
  %v20 = vpop.permute.xlu0 %19
  %v22 = vmul.f32 %v14, %v20
  %v23 = vmul.f32 %v15, %v20
  %v24 = vld [vmem:[%s2] sm:$0xff]
  %26 = vset.pattern.permute.xlu0 0
  %27 = vperm.xlu0 %26, %v24
  %v28 = vpop.permute.xlu0 %27
  %v30 = vadd.f32 %v22, %v28
  %v31 = vadd.f32 %v23, %v28
  %v32 = vmax.f32 %v30, 0.0
  %v33 = vmax.f32 %v31, 0.0
  %34 = vst [vmem:[%s3] sm:$0xff] %v32
  %35 = vst [vmem:[%s3 + $0x8] sm:$0xff] %v33
  // Predicated region
  $region14: #{relevance_propagation_bottleneck.27} parent=0 // pred_check
    _
  $region15: #{relevance_propagation_bottleneck.27} parent=0 // pred_check_branch
    %37 = sbr.rel (0) target = $region17
  $region16: #{relevance_propagation_bottleneck.27} parent=0 // pred_region
    _
  $region17: #{relevance_propagation_bottleneck.27} parent=0 // pred_fallthru
    _
  // Predicated region
  $region18: #{relevance_propagation_bottleneck.27} parent=0 // pred_check
    _
  $region19: #{relevance_propagation_bottleneck.27} parent=0 // pred_check_branch
    %39 = sbr.rel (0) target = $region21
  $region20: #{relevance_propagation_bottleneck.27} parent=0 // pred_region
    _
  $region21: #{relevance_propagation_bottleneck.27} parent=0 // pred_fallthru
    _

// kernel: relevance_propagation_bottleneck.26
$region0: #{relevance_propagation_bottleneck.26}
  #allocation0 [shape = 'u32[]', space=smem, size = 0x4, offset = 0x4, fixed_abs, tag = 'smem constant byte address 0x4 - core index']
  #allocation1 [shape = 'u32[144,128]{1,0:T(1,128)}', space=vmem, size = 0x12000, scoped, tag = 'internal scratch']
  #allocation2 [shape = 'f32[128,128]{1,0:T(8,128)}', space=vmem, size = 0x10000, scoped, tag = 'scratch operand']
  %s0 = inlined_call_operand.vmem [shape: f32[512,128], index: 0, kind: input, shape index: {}]
  %s1 = inlined_call_operand.vmem [shape: f32[128,128], index: 1, kind: input, shape index: {}]
  %s2 = inlined_call_operand.vmem [shape: f32[512,128], index: 2, kind: output, shape index: {}]
  %s3 = sld [smem:[#allocation0]]
  $region45: #{relevance_propagation_bottleneck.26} parent=0
    _
  %s5 = ssub.s32 1, %s3
  %s6 = scalar_select 0, %s5, %s3
  loop: start=0, step=1, limit=6
  $region2: #{relevance_propagation_bottleneck.26} parent=0 // loop_pre_header
    _
  $region3: #{relevance_propagation_bottleneck.26} parent=0 // loop_header
    %s8 = sphi 0, %s12
    %p9 = scmp.ge.s32.totalorder %s8, 6
    %s15 = sphi 0, %s34
    %s16 = sphi 0, %s30
    %s17 = sphi 0, %s26
    %s18 = sphi 0, %s15
    %s19 = sphi 0, %s16
    %s20 = sphi 0, %s17
    %s21 = sphi 0, %s18
    %s22 = sphi 0, %s19
    %s23 = sphi 0, %s20
    %s39 = sphi 0, %s41
    %s42 = sphi 0, %s39
    %s43 = sphi 0, %s42
    %s59 = sphi 0, %s43
    %s67 = sphi 0, %s69
    %s70 = sphi 0, %s67
    %s71 = sphi 0, %s70
    %s87 = sphi 0, %s71
    %s95 = sphi 0, %s97
    %s98 = sphi 0, %s95
    %s99 = sphi 0, %s98
    %s115 = sphi 0, %s99
  $region4: #{relevance_propagation_bottleneck.26} parent=0 // loop_header_branch
    %11 = sbr.rel (%p9) target = $region8
  $region5: #{relevance_propagation_bottleneck.26} parent=0 // loop_body
    %s13 = ssub.s32 %s8, 1
    %s14 = ssub.s32 %s8, 2
    %s24 = sadd.s32 1, %s17
    %p25 = scmp.ge.s32.totalorder %s24, 1
    %s26 = scalar_select %p25, 0, %s24
    %s27 = sadd.s32 1, %s16
    %s28 = scalar_select %p25, %s27, %s16
    %p29 = scmp.ge.s32.totalorder %s28, 1
    %s30 = scalar_select %p29, 0, %s28
    %s31 = sadd.s32 1, %s15
    %s32 = scalar_select %p29, %s31, %s15
    %p33 = scmp.ge.s32.totalorder %s32, 4
    %s34 = scalar_select %p33, 0, %s32
    %s35 = ssub.s32 %s15, %s34
    %s36 = ssub.s32 %s17, %s26
    %s37 = sor.u32 %s35, %s36
    %p38 = scmp.eq.s32.totalorder %s37, 0
    %s40 = sadd.s32 %s39, 1
    %s41 = scalar_select %p38, %s39, %s40
    %p44 = pneg %p38
    %p45 = scmp.eq.s32.totalorder %s8, 3
    %p46 = por %p44, %p45
    %p47 = scmp.ne.s32.totalorder %s39, %s42
    %p48 = scmp.eq.s32.totalorder %s8, 0
    %p49 = por %p47, %p48
    %p50 = scmp.ne.s32.totalorder %s39, %s42
    %p51 = scmp.eq.s32.totalorder %s13, 3
    %p52 = por %p50, %p51
    %p53 = scmp.ne.s32.totalorder %s42, %s43
    %p54 = scmp.eq.s32.totalorder %s13, 0
    %p55 = por %p53, %p54
    %p56 = scmp.ne.s32.totalorder %s42, %s43
    %p57 = scmp.eq.s32.totalorder %s14, 3
    %p58 = por %p56, %p57
    %p60 = scmp.ne.s32.totalorder %s43, %s59
    %p61 = scmp.eq.s32.totalorder %s14, 0
    %p62 = por %p60, %p61
    %s63 = ssub.s32 %s17, %s26
    %s64 = ssub.s32 %s16, %s30
    %s65 = sor.u32 %s63, %s64
    %p66 = scmp.eq.s32.totalorder %s65, 0
    %s68 = sadd.s32 %s67, 1
    %s69 = scalar_select %p66, %s67, %s68
    %p72 = pneg %p66
    %p73 = scmp.eq.s32.totalorder %s8, 3
    %p74 = por %p72, %p73
    %p75 = scmp.ne.s32.totalorder %s67, %s70
    %p76 = scmp.eq.s32.totalorder %s8, 0
    %p77 = por %p75, %p76
    %p78 = scmp.ne.s32.totalorder %s67, %s70
    %p79 = scmp.eq.s32.totalorder %s13, 3
    %p80 = por %p78, %p79
    %p81 = scmp.ne.s32.totalorder %s70, %s71
    %p82 = scmp.eq.s32.totalorder %s13, 0
    %p83 = por %p81, %p82
    %p84 = scmp.ne.s32.totalorder %s70, %s71
    %p85 = scmp.eq.s32.totalorder %s14, 3
    %p86 = por %p84, %p85
    %p88 = scmp.ne.s32.totalorder %s71, %s87
    %p89 = scmp.eq.s32.totalorder %s14, 0
    %p90 = por %p88, %p89
    %s91 = ssub.s32 %s15, %s34
    %s92 = ssub.s32 %s16, %s30
    %s93 = sor.u32 %s91, %s92
    %p94 = scmp.eq.s32.totalorder %s93, 0
    %s96 = sadd.s32 %s95, 1
    %s97 = scalar_select %p94, %s95, %s96
    %p100 = pneg %p94
    %p101 = scmp.eq.s32.totalorder %s8, 3
    %p102 = por %p100, %p101
    %p103 = scmp.ne.s32.totalorder %s95, %s98
    %p104 = scmp.eq.s32.totalorder %s8, 0
    %p105 = por %p103, %p104
    %p106 = scmp.ne.s32.totalorder %s95, %s98
    %p107 = scmp.eq.s32.totalorder %s13, 3
    %p108 = por %p106, %p107
    %p109 = scmp.ne.s32.totalorder %s98, %s99
    %p110 = scmp.eq.s32.totalorder %s13, 0
    %p111 = por %p109, %p110
    %p112 = scmp.ne.s32.totalorder %s98, %s99
    %p113 = scmp.eq.s32.totalorder %s14, 3
    %p114 = por %p112, %p113
    %p116 = scmp.ne.s32.totalorder %s99, %s115
    %p117 = scmp.eq.s32.totalorder %s14, 0
    %p118 = por %p116, %p117
    %p119 = scmp.le.s32.totalorder 1, %s8
    %p120 = scmp.lt.s32.totalorder %s8, 5
    %p121 = pnand %p119, %p120
    %p122 = pneg %p121
    // Predicated region
    $region9: #{relevance_propagation_bottleneck.26} parent=5 // pred_check
      _
    $region10: #{relevance_propagation_bottleneck.26} parent=5 // pred_check_branch
      %124 = sbr.rel (%p121) target = $region12
    $region11: #{relevance_propagation_bottleneck.26} parent=5 // pred_region
      %s125 = ssub.s32 %s8, 1
      // Predicated region
      $region13: #{relevance_propagation_bottleneck.26} parent=11 // pred_check
        %p126 = pneg %p83
      $region14: #{relevance_propagation_bottleneck.26} parent=11 // pred_check_branch
        %128 = sbr.rel (%p126) target = $region16
      $region15: #{relevance_propagation_bottleneck.26} parent=11 // pred_region
        %s129 = smul.u32 16, %s20
        %p130 = scmp.lt.s32.totalorder %s129, 15
        %s131 = scalar_select %p130, %s129, 15
        %p132 = scmp.lt.s32.totalorder %s19, 0
        %s133 = scalar_select %p132, %s19, 0
        %s134 = sadd.s32 %s133, %s131
        %s135 = smul.addr %s134, 8
        %s136 = scalar_lea.vmem %s1, %s135
        %s137 = smul.u32 16, %s20
      $region16: #{relevance_propagation_bottleneck.26} parent=11 // pred_fallthru
        _
    $region12: #{relevance_propagation_bottleneck.26} parent=5 // pred_fallthru
      _
    %p138 = scmp.lt.s32.totalorder %s8, 4
    // Predicated region
    $region17: #{relevance_propagation_bottleneck.26} parent=5 // pred_check
      %p139 = pneg %p138
    $region18: #{relevance_propagation_bottleneck.26} parent=5 // pred_check_branch
      %141 = sbr.rel (%p139) target = $region20
    $region19: #{relevance_propagation_bottleneck.26} parent=5 // pred_region
      // Predicated region
      $region21: #{relevance_propagation_bottleneck.26} parent=19 // pred_check
        %p142 = pneg %p49
      $region22: #{relevance_propagation_bottleneck.26} parent=19 // pred_check_branch
        %144 = sbr.rel (%p142) target = $region24
      $region23: #{relevance_propagation_bottleneck.26} parent=19 // pred_region
        %s145 = smul.u32 16, %s15
        %p146 = scmp.lt.s32.totalorder %s145, 63
        %s147 = scalar_select %p146, %s145, 63
        %p148 = scmp.lt.s32.totalorder %s17, 0
        %s149 = scalar_select %p148, %s17, 0
        %s150 = sadd.s32 %s149, %s147
        %s151 = smul.addr %s150, 8
        %s152 = scalar_lea.vmem %s0, %s151
        %s153 = smul.u32 16, %s15
      $region24: #{relevance_propagation_bottleneck.26} parent=19 // pred_fallthru
        _
    $region20: #{relevance_propagation_bottleneck.26} parent=5 // pred_fallthru
      _
    %p154 = scmp.le.s32.totalorder 1, %s8
    %p155 = scmp.lt.s32.totalorder %s8, 5
    %p156 = pnand %p154, %p155
    %p157 = pneg %p156
    // Predicated region
    $region25: #{relevance_propagation_bottleneck.26} parent=5 // pred_check
      _
    $region26: #{relevance_propagation_bottleneck.26} parent=5 // pred_check_branch
      %159 = sbr.rel (%p156) target = $region28
    $region27: #{relevance_propagation_bottleneck.26} parent=5 // pred_region
      %s160 = ssub.s32 %s8, 1
      %s161 = smul.u32 16, %s18
      %p162 = scmp.lt.s32.totalorder %s161, 63
      %s163 = scalar_select %p162, %s161, 63
      %p164 = scmp.lt.s32.totalorder %s20, 0
      %s165 = scalar_select %p164, %s20, 0
      %s166 = sadd.s32 %s165, %s163
      %s167 = smul.addr %s166, 8
      %s168 = scalar_lea.vmem %s0, %s167
      %p169 = pneg %p55
      %p170 = pneg %p52
      %s171 = smul.u32 16, %s20
      %p172 = scmp.lt.s32.totalorder %s171, 15
      %s173 = scalar_select %p172, %s171, 15
      %p174 = scmp.lt.s32.totalorder %s19, 0
      %s175 = scalar_select %p174, %s19, 0
      %s176 = sadd.s32 %s175, %s173
      %s177 = smul.addr %s176, 8
      %s178 = scalar_lea.vmem %s1, %s177
      %p179 = pneg %p83
      %p180 = pneg %p80
      %p181 = pneg %p111
      %p182 = pneg %p108
      %s183 = smul.u32 16, %s18
      %p184 = scmp.lt.s32.totalorder %s183, 63
      %s185 = scalar_select %p184, %s183, 63
      %p186 = scmp.lt.s32.totalorder %s19, 0
      %s187 = scalar_select %p186, %s19, 0
      %s188 = sadd.s32 %s187, %s185
      %s189 = smul.addr %s188, 8
      %s190 = scalar_lea.vmem %s2, %s189
      %s191 = smul.u32 16, %s18
      %p192 = scmp.lt.s32.totalorder %s191, 63
      %s193 = scalar_select %p192, %s191, 63
      %p194 = scmp.lt.s32.totalorder %s20, 0
      %s195 = scalar_select %p194, %s20, 0
      %s196 = sadd.s32 %s195, %s193
      %s197 = smul.addr %s196, 8
      %s198 = scalar_lea.vmem %s0, %s197
      %s199 = smul.u32 16, %s18
      %s200 = smul.u32 16, %s20
      %p201 = scmp.lt.s32.totalorder %s200, 15
      %s202 = scalar_select %p201, %s200, 15
      %p203 = scmp.lt.s32.totalorder %s19, 0
      %s204 = scalar_select %p203, %s19, 0
      %s205 = sadd.s32 %s204, %s202
      %s206 = smul.addr %s205, 8
      %s207 = scalar_lea.vmem %s1, %s206
      %s208 = smul.u32 16, %s20
      %s209 = smul.u32 16, %s18
      %p210 = scmp.lt.s32.totalorder %s209, 63
      %s211 = scalar_select %p210, %s209, 63
      %p212 = scmp.lt.s32.totalorder %s19, 0
      %s213 = scalar_select %p212, %s19, 0
      %s214 = sadd.s32 %s213, %s211
      %s215 = smul.addr %s214, 8
      %s216 = scalar_lea.vmem %s2, %s215
      %s217 = smul.u32 16, %s18
      %p218 = scmp.eq.s32.totalorder %s20, 0
      // Predicated region
      $region29: #{relevance_propagation_bottleneck.26} parent=27 // pred_check
        %p219 = pneg %p218
      $region30: #{relevance_propagation_bottleneck.26} parent=27 // pred_check_branch
        %221 = sbr.rel (%p219) target = $region32
      $region31: #{relevance_propagation_bottleneck.26} parent=27 // pred_region
        %222 = vst [vmem:[#allocation2] sm:$0xff] 0.0
        %223 = vst [vmem:[#allocation2 + $0x8] sm:$0xff] 0.0
        %224 = vst [vmem:[#allocation2 + $0x10] sm:$0xff] 0.0
        %225 = vst [vmem:[#allocation2 + $0x18] sm:$0xff] 0.0
        %226 = vst [vmem:[#allocation2 + $0x20] sm:$0xff] 0.0
        %227 = vst [vmem:[#allocation2 + $0x28] sm:$0xff] 0.0
        %228 = vst [vmem:[#allocation2 + $0x30] sm:$0xff] 0.0
        %229 = vst [vmem:[#allocation2 + $0x38] sm:$0xff] 0.0
        %230 = vst [vmem:[#allocation2 + $0x40] sm:$0xff] 0.0
        %231 = vst [vmem:[#allocation2 + $0x48] sm:$0xff] 0.0
        %232 = vst [vmem:[#allocation2 + $0x50] sm:$0xff] 0.0
        %233 = vst [vmem:[#allocation2 + $0x58] sm:$0xff] 0.0
        %234 = vst [vmem:[#allocation2 + $0x60] sm:$0xff] 0.0
        %235 = vst [vmem:[#allocation2 + $0x68] sm:$0xff] 0.0
        %236 = vst [vmem:[#allocation2 + $0x70] sm:$0xff] 0.0
        %237 = vst [vmem:[#allocation2 + $0x78] sm:$0xff] 0.0
      $region32: #{relevance_propagation_bottleneck.26} parent=27 // pred_fallthru
        _
      %v238 = vld [vmem:[#allocation2] sm:$0xff]
      %v239 = vld [vmem:[#allocation2 + $0x8] sm:$0xff]
      %v240 = vld [vmem:[#allocation2 + $0x10] sm:$0xff]
      %v241 = vld [vmem:[#allocation2 + $0x18] sm:$0xff]
      %v242 = vld [vmem:[#allocation2 + $0x20] sm:$0xff]
      %v243 = vld [vmem:[#allocation2 + $0x28] sm:$0xff]
      %v244 = vld [vmem:[#allocation2 + $0x30] sm:$0xff]
      %v245 = vld [vmem:[#allocation2 + $0x38] sm:$0xff]
      %v246 = vld [vmem:[#allocation2 + $0x40] sm:$0xff]
      %v247 = vld [vmem:[#allocation2 + $0x48] sm:$0xff]
      %v248 = vld [vmem:[#allocation2 + $0x50] sm:$0xff]
      %v249 = vld [vmem:[#allocation2 + $0x58] sm:$0xff]
      %v250 = vld [vmem:[#allocation2 + $0x60] sm:$0xff]
      %v251 = vld [vmem:[#allocation2 + $0x68] sm:$0xff]
      %v252 = vld [vmem:[#allocation2 + $0x70] sm:$0xff]
      %v253 = vld [vmem:[#allocation2 + $0x78] sm:$0xff]
      %v254 = vld [vmem:[%s198] sm:$0xff]
      %v255 = vld [vmem:[%s198 + $0x8] sm:$0xff]
      %v256 = vld [vmem:[%s198 + $0x10] sm:$0xff]
      %v257 = vld [vmem:[%s198 + $0x18] sm:$0xff]
      %v258 = vld [vmem:[%s198 + $0x20] sm:$0xff]
      %v259 = vld [vmem:[%s198 + $0x28] sm:$0xff]
      %v260 = vld [vmem:[%s198 + $0x30] sm:$0xff]
      %v261 = vld [vmem:[%s198 + $0x38] sm:$0xff]
      %v262 = vld [vmem:[%s198 + $0x40] sm:$0xff]
      %v263 = vld [vmem:[%s198 + $0x48] sm:$0xff]
      %v264 = vld [vmem:[%s198 + $0x50] sm:$0xff]
      %v265 = vld [vmem:[%s198 + $0x58] sm:$0xff]
      %v266 = vld [vmem:[%s198 + $0x60] sm:$0xff]
      %v267 = vld [vmem:[%s198 + $0x68] sm:$0xff]
      %v268 = vld [vmem:[%s198 + $0x70] sm:$0xff]
      %v269 = vld [vmem:[%s198 + $0x78] sm:$0xff]
      %v270 = vld [vmem:[%s207] sm:$0xff]
      %v271 = vld [vmem:[%s207 + $0x8] sm:$0xff]
      %v272 = vld [vmem:[%s207 + $0x10] sm:$0xff]
      %v273 = vld [vmem:[%s207 + $0x18] sm:$0xff]
      %v274 = vld [vmem:[%s207 + $0x20] sm:$0xff]
      %v275 = vld [vmem:[%s207 + $0x28] sm:$0xff]
      %v276 = vld [vmem:[%s207 + $0x30] sm:$0xff]
      %v277 = vld [vmem:[%s207 + $0x38] sm:$0xff]
      %v278 = vld [vmem:[%s207 + $0x40] sm:$0xff]
      %v279 = vld [vmem:[%s207 + $0x48] sm:$0xff]
      %v280 = vld [vmem:[%s207 + $0x50] sm:$0xff]
      %v281 = vld [vmem:[%s207 + $0x58] sm:$0xff]
      %v282 = vld [vmem:[%s207 + $0x60] sm:$0xff]
      %v283 = vld [vmem:[%s207 + $0x68] sm:$0xff]
      %v284 = vld [vmem:[%s207 + $0x70] sm:$0xff]
      %v285 = vld [vmem:[%s207 + $0x78] sm:$0xff]
      %286 = vmatprep.subr.mxu0 0.0
      %287 = vmatpush1.msra.mxu0 %v285
      %288 = vmatprep.subr.mxu0 0.0
      %289 = vmatpush1.msra.mxu0 %v284
      %290 = vmatprep.subr.mxu0 0.0
      %291 = vmatpush1.msra.mxu0 %v283
      %292 = vmatprep.subr.mxu0 0.0
      %293 = vmatpush1.msra.mxu0 %v282
      %294 = vmatprep.subr.mxu0 0.0
      %295 = vmatpush1.msra.mxu0 %v281
      %296 = vmatprep.subr.mxu0 0.0
      %297 = vmatpush1.msra.mxu0 %v280
      %298 = vmatprep.subr.mxu0 0.0
      %299 = vmatpush1.msra.mxu0 %v279
      %300 = vmatprep.subr.mxu0 0.0
      %301 = vmatpush1.msra.mxu0 %v278
      %302 = vmatprep.subr.mxu0 0.0
      %303 = vmatpush1.msra.mxu0 %v277
      %304 = vmatprep.subr.mxu0 0.0
      %305 = vmatpush1.msra.mxu0 %v276
      %306 = vmatprep.subr.mxu0 0.0
      %307 = vmatpush1.msra.mxu0 %v275
      %308 = vmatprep.subr.mxu0 0.0
      %309 = vmatpush1.msra.mxu0 %v274
      %310 = vmatprep.subr.mxu0 0.0
      %311 = vmatpush1.msra.mxu0 %v273
      %312 = vmatprep.subr.mxu0 0.0
      %313 = vmatpush1.msra.mxu0 %v272
      %314 = vmatprep.subr.mxu0 0.0
      %315 = vmatpush1.msra.mxu0 %v271
      %316 = vmatprep.subr.mxu0 0.0
      %317 = vmatpush1.msra.mxu0 %v270
      %318 = vmatprep.subr.mxu0 0.0
      %319 = vmatpush2.msra.mxu0 0.0
      %320 = vmatprep.subr.mxu0 0.0
      %321 = vmatpush2.msra.mxu0 0.0
      %322 = vmatprep.subr.mxu0 0.0
      %323 = vmatpush2.msra.mxu0 0.0
      %324 = vmatprep.subr.mxu0 0.0
      %325 = vmatpush2.msra.mxu0 0.0
      %326 = vmatprep.subr.mxu0 0.0
      %327 = vmatpush2.msra.mxu0 0.0
      %328 = vmatprep.subr.mxu0 0.0
      %329 = vmatpush2.msra.mxu0 0.0
      %330 = vmatprep.subr.mxu0 0.0
      %331 = vmatpush2.msra.mxu0 0.0
      %332 = vmatprep.subr.mxu0 0.0
      %333 = vmatpush2.msra.mxu0 0.0
      %334 = vmatprep.subr.mxu0 0.0
      %335 = vmatpush2.msra.mxu0 0.0
      %336 = vmatprep.subr.mxu0 0.0
      %337 = vmatpush2.msra.mxu0 0.0
      %338 = vmatprep.subr.mxu0 0.0
      %339 = vmatpush2.msra.mxu0 0.0
      %340 = vmatprep.subr.mxu0 0.0
      %341 = vmatpush2.msra.mxu0 0.0
      %342 = vmatprep.subr.mxu0 0.0
      %343 = vmatpush2.msra.mxu0 0.0
      %344 = vmatprep.subr.mxu0 0.0
      %345 = vmatpush2.msra.mxu0 0.0
      %346 = vmatprep.subr.mxu0 0.0
      %347 = vmatpush2.msra.mxu0 0.0
      %348 = vmatprep.subr.mxu0 0.0
      %349 = vmatpush2.msra.mxu0 0.0
      %350 = vmatprep.mubr.f32.mxu0 0.0
      %351 = vmatmul.mubr.f32.gmra.mxu0 %v254
      %v352 = vpop.f32.mrf.mxu0
      %v353 = vadd.f32 0.0, %v352
      %v354 = vpop.f32.mrf.mxu0
      %355 = vmatprep.mubr.f32.mxu0 0.0
      %356 = vmatmul.mubr.f32.gmra.mxu0 %v255
      %v357 = vpop.f32.mrf.mxu0
      %v358 = vadd.f32 0.0, %v357
      %v359 = vpop.f32.mrf.mxu0
      %360 = vmatprep.mubr.f32.mxu0 0.0
      %361 = vmatmul.mubr.f32.gmra.mxu0 %v256
      %v362 = vpop.f32.mrf.mxu0
      %v363 = vadd.f32 0.0, %v362
      %v364 = vpop.f32.mrf.mxu0
      %365 = vmatprep.mubr.f32.mxu0 0.0
      %366 = vmatmul.mubr.f32.gmra.mxu0 %v257
      %v367 = vpop.f32.mrf.mxu0
      %v368 = vadd.f32 0.0, %v367
      %v369 = vpop.f32.mrf.mxu0
      %370 = vmatprep.mubr.f32.mxu0 0.0
      %371 = vmatmul.mubr.f32.gmra.mxu0 %v258
      %v372 = vpop.f32.mrf.mxu0
      %v373 = vadd.f32 0.0, %v372
      %v374 = vpop.f32.mrf.mxu0
      %375 = vmatprep.mubr.f32.mxu0 0.0
      %376 = vmatmul.mubr.f32.gmra.mxu0 %v259
      %v377 = vpop.f32.mrf.mxu0
      %v378 = vadd.f32 0.0, %v377
      %v379 = vpop.f32.mrf.mxu0
      %380 = vmatprep.mubr.f32.mxu0 0.0
      %381 = vmatmul.mubr.f32.gmra.mxu0 %v260
      %v382 = vpop.f32.mrf.mxu0
      %v383 = vadd.f32 0.0, %v382
      %v384 = vpop.f32.mrf.mxu0
      %385 = vmatprep.mubr.f32.mxu0 0.0
      %386 = vmatmul.mubr.f32.gmra.mxu0 %v261
      %v387 = vpop.f32.mrf.mxu0
      %v388 = vadd.f32 0.0, %v387
      %v389 = vpop.f32.mrf.mxu0
      %390 = vmatprep.mubr.f32.mxu0 0.0
      %391 = vmatmul.mubr.f32.gmra.mxu0 %v262
      %v392 = vpop.f32.mrf.mxu0
      %v393 = vadd.f32 0.0, %v392
      %v394 = vpop.f32.mrf.mxu0
      %395 = vmatprep.mubr.f32.mxu0 0.0
      %396 = vmatmul.mubr.f32.gmra.mxu0 %v263
      %v397 = vpop.f32.mrf.mxu0
      %v398 = vadd.f32 0.0, %v397
      %v399 = vpop.f32.mrf.mxu0
      %400 = vmatprep.mubr.f32.mxu0 0.0
      %401 = vmatmul.mubr.f32.gmra.mxu0 %v264
      %v402 = vpop.f32.mrf.mxu0
      %v403 = vadd.f32 0.0, %v402
      %v404 = vpop.f32.mrf.mxu0
      %405 = vmatprep.mubr.f32.mxu0 0.0
      %406 = vmatmul.mubr.f32.gmra.mxu0 %v265
      %v407 = vpop.f32.mrf.mxu0
      %v408 = vadd.f32 0.0, %v407
      %v409 = vpop.f32.mrf.mxu0
      %410 = vmatprep.mubr.f32.mxu0 0.0
      %411 = vmatmul.mubr.f32.gmra.mxu0 %v266
      %v412 = vpop.f32.mrf.mxu0
      %v413 = vadd.f32 0.0, %v412
      %v414 = vpop.f32.mrf.mxu0
      %415 = vmatprep.mubr.f32.mxu0 0.0
      %416 = vmatmul.mubr.f32.gmra.mxu0 %v267
      %v417 = vpop.f32.mrf.mxu0
      %v418 = vadd.f32 0.0, %v417
      %v419 = vpop.f32.mrf.mxu0
      %420 = vmatprep.mubr.f32.mxu0 0.0
      %421 = vmatmul.mubr.f32.gmra.mxu0 %v268
      %v422 = vpop.f32.mrf.mxu0
      %v423 = vadd.f32 0.0, %v422
      %v424 = vpop.f32.mrf.mxu0
      %425 = vmatprep.mubr.f32.mxu0 0.0
      %426 = vmatmul.mubr.f32.gmra.mxu0 %v269
      %v427 = vpop.f32.mrf.mxu0
      %v428 = vadd.f32 0.0, %v427
      %v429 = vpop.f32.mrf.mxu0
      %430 = vdwg.mxu0
      %v431 = vadd.f32 %v238, %v353
      %v432 = vadd.f32 %v239, %v358
      %v433 = vadd.f32 %v240, %v363
      %v434 = vadd.f32 %v241, %v368
      %v435 = vadd.f32 %v242, %v373
      %v436 = vadd.f32 %v243, %v378
      %v437 = vadd.f32 %v244, %v383
      %v438 = vadd.f32 %v245, %v388
      %v439 = vadd.f32 %v246, %v393
      %v440 = vadd.f32 %v247, %v398
      %v441 = vadd.f32 %v248, %v403
      %v442 = vadd.f32 %v249, %v408
      %v443 = vadd.f32 %v250, %v413
      %v444 = vadd.f32 %v251, %v418
      %v445 = vadd.f32 %v252, %v423
      %v446 = vadd.f32 %v253, %v428
      %447 = vst [vmem:[#allocation2] sm:$0xff] %v431
      %448 = vst [vmem:[#allocation2 + $0x8] sm:$0xff] %v432
      %449 = vst [vmem:[#allocation2 + $0x10] sm:$0xff] %v433
      %450 = vst [vmem:[#allocation2 + $0x18] sm:$0xff] %v434
      %451 = vst [vmem:[#allocation2 + $0x20] sm:$0xff] %v435
      %452 = vst [vmem:[#allocation2 + $0x28] sm:$0xff] %v436
      %453 = vst [vmem:[#allocation2 + $0x30] sm:$0xff] %v437
      %454 = vst [vmem:[#allocation2 + $0x38] sm:$0xff] %v438
      %455 = vst [vmem:[#allocation2 + $0x40] sm:$0xff] %v439
      %456 = vst [vmem:[#allocation2 + $0x48] sm:$0xff] %v440
      %457 = vst [vmem:[#allocation2 + $0x50] sm:$0xff] %v441
      %458 = vst [vmem:[#allocation2 + $0x58] sm:$0xff] %v442
      %459 = vst [vmem:[#allocation2 + $0x60] sm:$0xff] %v443
      %460 = vst [vmem:[#allocation2 + $0x68] sm:$0xff] %v444
      %461 = vst [vmem:[#allocation2 + $0x70] sm:$0xff] %v445
      %462 = vst [vmem:[#allocation2 + $0x78] sm:$0xff] %v446
      %v463 = vld [vmem:[#allocation2] sm:$0xff]
      %v464 = vld [vmem:[#allocation2 + $0x8] sm:$0xff]
      %v465 = vld [vmem:[#allocation2 + $0x10] sm:$0xff]
      %v466 = vld [vmem:[#allocation2 + $0x18] sm:$0xff]
      %v467 = vld [vmem:[#allocation2 + $0x20] sm:$0xff]
      %v468 = vld [vmem:[#allocation2 + $0x28] sm:$0xff]
      %v469 = vld [vmem:[#allocation2 + $0x30] sm:$0xff]
      %v470 = vld [vmem:[#allocation2 + $0x38] sm:$0xff]
      %v471 = vld [vmem:[#allocation2 + $0x40] sm:$0xff]
      %v472 = vld [vmem:[#allocation2 + $0x48] sm:$0xff]
      %v473 = vld [vmem:[#allocation2 + $0x50] sm:$0xff]
      %v474 = vld [vmem:[#allocation2 + $0x58] sm:$0xff]
      %v475 = vld [vmem:[#allocation2 + $0x60] sm:$0xff]
      %v476 = vld [vmem:[#allocation2 + $0x68] sm:$0xff]
      %v477 = vld [vmem:[#allocation2 + $0x70] sm:$0xff]
      %v478 = vld [vmem:[#allocation2 + $0x78] sm:$0xff]
      %479 = vst [vmem:[%s216] sm:$0xff] %v463
      %480 = vst [vmem:[%s216 + $0x8] sm:$0xff] %v464
      %481 = vst [vmem:[%s216 + $0x10] sm:$0xff] %v465
      %482 = vst [vmem:[%s216 + $0x18] sm:$0xff] %v466
      %483 = vst [vmem:[%s216 + $0x20] sm:$0xff] %v467
      %484 = vst [vmem:[%s216 + $0x28] sm:$0xff] %v468
      %485 = vst [vmem:[%s216 + $0x30] sm:$0xff] %v469
      %486 = vst [vmem:[%s216 + $0x38] sm:$0xff] %v470
      %487 = vst [vmem:[%s216 + $0x40] sm:$0xff] %v471
      %488 = vst [vmem:[%s216 + $0x48] sm:$0xff] %v472
      %489 = vst [vmem:[%s216 + $0x50] sm:$0xff] %v473
      %490 = vst [vmem:[%s216 + $0x58] sm:$0xff] %v474
      %491 = vst [vmem:[%s216 + $0x60] sm:$0xff] %v475
      %492 = vst [vmem:[%s216 + $0x68] sm:$0xff] %v476
      %493 = vst [vmem:[%s216 + $0x70] sm:$0xff] %v477
      %494 = vst [vmem:[%s216 + $0x78] sm:$0xff] %v478
      %s495 = smul.u32 16, %s18
      %p496 = scmp.lt.s32.totalorder %s495, 63
      %s497 = scalar_select %p496, %s495, 63
      %p498 = scmp.lt.s32.totalorder %s19, 0
      %s499 = scalar_select %p498, %s19, 0
      %s500 = sadd.s32 %s499, %s497
      %s501 = smul.addr %s500, 8
      %s502 = scalar_lea.vmem %s2, %s501
      // Predicated region
      $region33: #{relevance_propagation_bottleneck.26} parent=27 // pred_check
        %p503 = pneg %p108
      $region34: #{relevance_propagation_bottleneck.26} parent=27 // pred_check_branch
        %505 = sbr.rel (%p503) target = $region36
      $region35: #{relevance_propagation_bottleneck.26} parent=27 // pred_region
        %s506 = smul.u32 16, %s18
      $region36: #{relevance_propagation_bottleneck.26} parent=27 // pred_fallthru
        _
    $region28: #{relevance_propagation_bottleneck.26} parent=5 // pred_fallthru
      _
    %p507 = scmp.le.s32.totalorder 2, %s8
    // Predicated region
    $region37: #{relevance_propagation_bottleneck.26} parent=5 // pred_check
      %p508 = pneg %p507
    $region38: #{relevance_propagation_bottleneck.26} parent=5 // pred_check_branch
      %510 = sbr.rel (%p508) target = $region40
    $region39: #{relevance_propagation_bottleneck.26} parent=5 // pred_region
      %s511 = ssub.s32 %s8, 2
      // Predicated region
      $region41: #{relevance_propagation_bottleneck.26} parent=39 // pred_check
        %p512 = pneg %p114
      $region42: #{relevance_propagation_bottleneck.26} parent=39 // pred_check_branch
        %514 = sbr.rel (%p512) target = $region44
      $region43: #{relevance_propagation_bottleneck.26} parent=39 // pred_region
        %s515 = smul.u32 16, %s21
        %p516 = scmp.lt.s32.totalorder %s515, 63
        %s517 = scalar_select %p516, %s515, 63
        %p518 = scmp.lt.s32.totalorder %s22, 0
        %s519 = scalar_select %p518, %s22, 0
        %s520 = sadd.s32 %s519, %s517
        %s521 = smul.addr %s520, 8
        %s522 = scalar_lea.vmem %s2, %s521
      $region44: #{relevance_propagation_bottleneck.26} parent=39 // pred_fallthru
        _
    $region40: #{relevance_propagation_bottleneck.26} parent=5 // pred_fallthru
      _
  $region6: #{relevance_propagation_bottleneck.26} parent=0 // loop_footer
    %s12 = sadd.s32 1, %s8
  $region7: #{relevance_propagation_bottleneck.26} parent=0 // loop_footer_branch
    %7 = sbr.rel target = $region3
  $region8: #{relevance_propagation_bottleneck.26} parent=0 // loop_exit
    _

// kernel: relevance_propagation_bottleneck.29
$region0: #{relevance_propagation_bottleneck.29}
  #allocation0 [shape = 'u32[]', space=smem, size = 0x4, offset = 0x4, fixed_abs, tag = 'smem constant byte address 0x4 - core index']
  #allocation1 [shape = 'u32[144,128]{1,0:T(1,128)}', space=vmem, size = 0x12000, scoped, tag = 'internal scratch']
  %s0 = inlined_call_operand.vmem [shape: f32[8,128], index: 0, kind: input, shape index: {}]
  %s1 = inlined_call_operand.vmem [shape: f32[8,1], index: 1, kind: input, shape index: {}]
  %s2 = inlined_call_operand.vmem [shape: f32[8,1], index: 2, kind: input, shape index: {}]
  %s3 = inlined_call_operand.vmem [shape: f32[8,128], index: 3, kind: output, shape index: {}]
  %s4 = sld [smem:[#allocation0]]
  $region22: #{relevance_propagation_bottleneck.29} parent=0
    _
  %s6 = ssub.s32 1, %s4
  %s7 = scalar_select 0, %s6, %s4
  // Predicated region
  $region2: #{relevance_propagation_bottleneck.29} parent=0 // pred_check
    _
  $region3: #{relevance_propagation_bottleneck.29} parent=0 // pred_check_branch
    %9 = sbr.rel (0) target = $region5
  $region4: #{relevance_propagation_bottleneck.29} parent=0 // pred_region
    _
  $region5: #{relevance_propagation_bottleneck.29} parent=0 // pred_fallthru
    _
  // Predicated region
  $region6: #{relevance_propagation_bottleneck.29} parent=0 // pred_check
    _
  $region7: #{relevance_propagation_bottleneck.29} parent=0 // pred_check_branch
    %11 = sbr.rel (0) target = $region9
  $region8: #{relevance_propagation_bottleneck.29} parent=0 // pred_region
    _
  $region9: #{relevance_propagation_bottleneck.29} parent=0 // pred_fallthru
    _
  // Predicated region
  $region10: #{relevance_propagation_bottleneck.29} parent=0 // pred_check
    _
  $region11: #{relevance_propagation_bottleneck.29} parent=0 // pred_check_branch
    %13 = sbr.rel (0) target = $region13
  $region12: #{relevance_propagation_bottleneck.29} parent=0 // pred_region
    _
  $region13: #{relevance_propagation_bottleneck.29} parent=0 // pred_fallthru
    _
  %v14 = vld [vmem:[%s0] sm:$0xff]
  %v15 = vld [vmem:[%s1] sm:$0xff]
  %17 = vset.pattern.permute.xlu0 0
  %18 = vperm.xlu0 %17, %v15
  %v19 = vpop.permute.xlu0 %18
  %v21 = vmul.f32 %v14, %v19
  %v22 = vld [vmem:[%s2] sm:$0xff]
  %24 = vset.pattern.permute.xlu0 0
  %25 = vperm.xlu0 %24, %v22
  %v26 = vpop.permute.xlu0 %25
  %v28 = vadd.f32 %v21, %v26
  %v29 = vmax.f32 %v28, 0.0
  %30 = vst [vmem:[%s3] sm:$0xff] %v29
  // Predicated region
  $region14: #{relevance_propagation_bottleneck.29} parent=0 // pred_check
    _
  $region15: #{relevance_propagation_bottleneck.29} parent=0 // pred_check_branch
    %32 = sbr.rel (0) target = $region17
  $region16: #{relevance_propagation_bottleneck.29} parent=0 // pred_region
    _
  $region17: #{relevance_propagation_bottleneck.29} parent=0 // pred_fallthru
    _
  // Predicated region
  $region18: #{relevance_propagation_bottleneck.29} parent=0 // pred_check
    _
  $region19: #{relevance_propagation_bottleneck.29} parent=0 // pred_check_branch
    %34 = sbr.rel (0) target = $region21
  $region20: #{relevance_propagation_bottleneck.29} parent=0 // pred_region
    _
  $region21: #{relevance_propagation_bottleneck.29} parent=0 // pred_fallthru
    _

// kernel: tile.63
$region0: #{tile.63}
  #allocation0 [shape = 's32[1]{0}', space=sflag, size = 0x4, scoped, tag = 'scoped memory for tile.63']
  %s0 = inlined_call_operand.vmem [shape: f32[16], index: 0, kind: input, shape index: {}]
  %s1 = inlined_call_operand.vmem [shape: f32[2,16], index: 1, kind: output, shape index: {}]
  // Predicated region
  $region2: #{tile.63} parent=0 // pred_check
    _
  $region3: #{tile.63} parent=0 // pred_check_branch
    %3 = sbr.rel (0) target = $region5
  $region4: #{tile.63} parent=0 // pred_region
    _
  $region5: #{tile.63} parent=0 // pred_fallthru
    _
  %v4 = vld [vmem:[%s0] ss:$0 sm:$0xff]
  %5 = vst [vmem:[%s1] sm:$0x3] %v4

// kernel: relevance_propagation_bottleneck.28
$region0: #{relevance_propagation_bottleneck.28}
  #allocation0 [shape = 'u32[]', space=smem, size = 0x4, offset = 0x4, fixed_abs, tag = 'smem constant byte address 0x4 - core index']
  #allocation1 [shape = 'u32[144,128]{1,0:T(1,128)}', space=vmem, size = 0x12000, scoped, tag = 'internal scratch']
  #allocation2 [shape = 'f32[128,128]{1,0:T(8,128)}', space=vmem, size = 0x10000, scoped, tag = 'scratch operand']
  %s0 = inlined_call_operand.vmem [shape: f32[128,128], index: 0, kind: input, shape index: {}]
  %s1 = inlined_call_operand.vmem [shape: f32[128,128], index: 1, kind: input, shape index: {}]
  %s2 = inlined_call_operand.vmem [shape: f32[128,128], index: 2, kind: output, shape index: {}]
  %s3 = sld [smem:[#allocation0]]
  $region22: #{relevance_propagation_bottleneck.28} parent=0
    _
  %s5 = ssub.s32 1, %s3
  %s6 = scalar_select 0, %s5, %s3
  // Predicated region
  $region2: #{relevance_propagation_bottleneck.28} parent=0 // pred_check
    _
  $region3: #{relevance_propagation_bottleneck.28} parent=0 // pred_check_branch
    %8 = sbr.rel (0) target = $region5
  $region4: #{relevance_propagation_bottleneck.28} parent=0 // pred_region
    _
  $region5: #{relevance_propagation_bottleneck.28} parent=0 // pred_fallthru
    _
  // Predicated region
  $region6: #{relevance_propagation_bottleneck.28} parent=0 // pred_check
    _
  $region7: #{relevance_propagation_bottleneck.28} parent=0 // pred_check_branch
    %10 = sbr.rel (0) target = $region9
  $region8: #{relevance_propagation_bottleneck.28} parent=0 // pred_region
    _
  $region9: #{relevance_propagation_bottleneck.28} parent=0 // pred_fallthru
    _
  %p11 = scmp.eq.s32.totalorder 0, 0
  // Predicated region
  $region10: #{relevance_propagation_bottleneck.28} parent=0 // pred_check
    %p12 = pneg %p11
  $region11: #{relevance_propagation_bottleneck.28} parent=0 // pred_check_branch
    %14 = sbr.rel (%p12) target = $region13
  $region12: #{relevance_propagation_bottleneck.28} parent=0 // pred_region
    %15 = vst [vmem:[#allocation2] sm:$0xff] 0.0
    %16 = vst [vmem:[#allocation2 + $0x8] sm:$0xff] 0.0
    %17 = vst [vmem:[#allocation2 + $0x10] sm:$0xff] 0.0
    %18 = vst [vmem:[#allocation2 + $0x18] sm:$0xff] 0.0
    %19 = vst [vmem:[#allocation2 + $0x20] sm:$0xff] 0.0
    %20 = vst [vmem:[#allocation2 + $0x28] sm:$0xff] 0.0
    %21 = vst [vmem:[#allocation2 + $0x30] sm:$0xff] 0.0
    %22 = vst [vmem:[#allocation2 + $0x38] sm:$0xff] 0.0
    %23 = vst [vmem:[#allocation2 + $0x40] sm:$0xff] 0.0
    %24 = vst [vmem:[#allocation2 + $0x48] sm:$0xff] 0.0
    %25 = vst [vmem:[#allocation2 + $0x50] sm:$0xff] 0.0
    %26 = vst [vmem:[#allocation2 + $0x58] sm:$0xff] 0.0
    %27 = vst [vmem:[#allocation2 + $0x60] sm:$0xff] 0.0
    %28 = vst [vmem:[#allocation2 + $0x68] sm:$0xff] 0.0
    %29 = vst [vmem:[#allocation2 + $0x70] sm:$0xff] 0.0
    %30 = vst [vmem:[#allocation2 + $0x78] sm:$0xff] 0.0
  $region13: #{relevance_propagation_bottleneck.28} parent=0 // pred_fallthru
    _
  %v31 = vld [vmem:[#allocation2] sm:$0xff]
  %v32 = vld [vmem:[#allocation2 + $0x8] sm:$0xff]
  %v33 = vld [vmem:[#allocation2 + $0x10] sm:$0xff]
  %v34 = vld [vmem:[#allocation2 + $0x18] sm:$0xff]
  %v35 = vld [vmem:[#allocation2 + $0x20] sm:$0xff]
  %v36 = vld [vmem:[#allocation2 + $0x28] sm:$0xff]
  %v37 = vld [vmem:[#allocation2 + $0x30] sm:$0xff]
  %v38 = vld [vmem:[#allocation2 + $0x38] sm:$0xff]
  %v39 = vld [vmem:[#allocation2 + $0x40] sm:$0xff]
  %v40 = vld [vmem:[#allocation2 + $0x48] sm:$0xff]
  %v41 = vld [vmem:[#allocation2 + $0x50] sm:$0xff]
  %v42 = vld [vmem:[#allocation2 + $0x58] sm:$0xff]
  %v43 = vld [vmem:[#allocation2 + $0x60] sm:$0xff]
  %v44 = vld [vmem:[#allocation2 + $0x68] sm:$0xff]
  %v45 = vld [vmem:[#allocation2 + $0x70] sm:$0xff]
  %v46 = vld [vmem:[#allocation2 + $0x78] sm:$0xff]
  %v47 = vld [vmem:[%s0] sm:$0xff]
  %v48 = vld [vmem:[%s0 + $0x8] sm:$0xff]
  %v49 = vld [vmem:[%s0 + $0x10] sm:$0xff]
  %v50 = vld [vmem:[%s0 + $0x18] sm:$0xff]
  %v51 = vld [vmem:[%s0 + $0x20] sm:$0xff]
  %v52 = vld [vmem:[%s0 + $0x28] sm:$0xff]
  %v53 = vld [vmem:[%s0 + $0x30] sm:$0xff]
  %v54 = vld [vmem:[%s0 + $0x38] sm:$0xff]
  %v55 = vld [vmem:[%s0 + $0x40] sm:$0xff]
  %v56 = vld [vmem:[%s0 + $0x48] sm:$0xff]
  %v57 = vld [vmem:[%s0 + $0x50] sm:$0xff]
  %v58 = vld [vmem:[%s0 + $0x58] sm:$0xff]
  %v59 = vld [vmem:[%s0 + $0x60] sm:$0xff]
  %v60 = vld [vmem:[%s0 + $0x68] sm:$0xff]
  %v61 = vld [vmem:[%s0 + $0x70] sm:$0xff]
  %v62 = vld [vmem:[%s0 + $0x78] sm:$0xff]
  %v63 = vld [vmem:[%s1] sm:$0xff]
  %v64 = vld [vmem:[%s1 + $0x8] sm:$0xff]
  %v65 = vld [vmem:[%s1 + $0x10] sm:$0xff]
  %v66 = vld [vmem:[%s1 + $0x18] sm:$0xff]
  %v67 = vld [vmem:[%s1 + $0x20] sm:$0xff]
  %v68 = vld [vmem:[%s1 + $0x28] sm:$0xff]
  %v69 = vld [vmem:[%s1 + $0x30] sm:$0xff]
  %v70 = vld [vmem:[%s1 + $0x38] sm:$0xff]
  %v71 = vld [vmem:[%s1 + $0x40] sm:$0xff]
  %v72 = vld [vmem:[%s1 + $0x48] sm:$0xff]
  %v73 = vld [vmem:[%s1 + $0x50] sm:$0xff]
  %v74 = vld [vmem:[%s1 + $0x58] sm:$0xff]
  %v75 = vld [vmem:[%s1 + $0x60] sm:$0xff]
  %v76 = vld [vmem:[%s1 + $0x68] sm:$0xff]
  %v77 = vld [vmem:[%s1 + $0x70] sm:$0xff]
  %v78 = vld [vmem:[%s1 + $0x78] sm:$0xff]
  %79 = vmatprep.subr.mxu0 0.0
  %80 = vmatpush1.msra.mxu0 %v78
  %81 = vmatprep.subr.mxu0 0.0
  %82 = vmatpush1.msra.mxu0 %v77
  %83 = vmatprep.subr.mxu0 0.0
  %84 = vmatpush1.msra.mxu0 %v76
  %85 = vmatprep.subr.mxu0 0.0
  %86 = vmatpush1.msra.mxu0 %v75
  %87 = vmatprep.subr.mxu0 0.0
  %88 = vmatpush1.msra.mxu0 %v74
  %89 = vmatprep.subr.mxu0 0.0
  %90 = vmatpush1.msra.mxu0 %v73
  %91 = vmatprep.subr.mxu0 0.0
  %92 = vmatpush1.msra.mxu0 %v72
  %93 = vmatprep.subr.mxu0 0.0
  %94 = vmatpush1.msra.mxu0 %v71
  %95 = vmatprep.subr.mxu0 0.0
  %96 = vmatpush1.msra.mxu0 %v70
  %97 = vmatprep.subr.mxu0 0.0
  %98 = vmatpush1.msra.mxu0 %v69
  %99 = vmatprep.subr.mxu0 0.0
  %100 = vmatpush1.msra.mxu0 %v68
  %101 = vmatprep.subr.mxu0 0.0
  %102 = vmatpush1.msra.mxu0 %v67
  %103 = vmatprep.subr.mxu0 0.0
  %104 = vmatpush1.msra.mxu0 %v66
  %105 = vmatprep.subr.mxu0 0.0
  %106 = vmatpush1.msra.mxu0 %v65
  %107 = vmatprep.subr.mxu0 0.0
  %108 = vmatpush1.msra.mxu0 %v64
  %109 = vmatprep.subr.mxu0 0.0
  %110 = vmatpush1.msra.mxu0 %v63
  %111 = vmatprep.subr.mxu0 0.0
  %112 = vmatpush2.msra.mxu0 0.0
  %113 = vmatprep.subr.mxu0 0.0
  %114 = vmatpush2.msra.mxu0 0.0
  %115 = vmatprep.subr.mxu0 0.0
  %116 = vmatpush2.msra.mxu0 0.0
  %117 = vmatprep.subr.mxu0 0.0
  %118 = vmatpush2.msra.mxu0 0.0
  %119 = vmatprep.subr.mxu0 0.0
  %120 = vmatpush2.msra.mxu0 0.0
  %121 = vmatprep.subr.mxu0 0.0
  %122 = vmatpush2.msra.mxu0 0.0
  %123 = vmatprep.subr.mxu0 0.0
  %124 = vmatpush2.msra.mxu0 0.0
  %125 = vmatprep.subr.mxu0 0.0
  %126 = vmatpush2.msra.mxu0 0.0
  %127 = vmatprep.subr.mxu0 0.0
  %128 = vmatpush2.msra.mxu0 0.0
  %129 = vmatprep.subr.mxu0 0.0
  %130 = vmatpush2.msra.mxu0 0.0
  %131 = vmatprep.subr.mxu0 0.0
  %132 = vmatpush2.msra.mxu0 0.0
  %133 = vmatprep.subr.mxu0 0.0
  %134 = vmatpush2.msra.mxu0 0.0
  %135 = vmatprep.subr.mxu0 0.0
  %136 = vmatpush2.msra.mxu0 0.0
  %137 = vmatprep.subr.mxu0 0.0
  %138 = vmatpush2.msra.mxu0 0.0
  %139 = vmatprep.subr.mxu0 0.0
  %140 = vmatpush2.msra.mxu0 0.0
  %141 = vmatprep.subr.mxu0 0.0
  %142 = vmatpush2.msra.mxu0 0.0
  %143 = vmatprep.mubr.f32.mxu0 0.0
  %144 = vmatmul.mubr.f32.gmra.mxu0 %v47
  %v145 = vpop.f32.mrf.mxu0
  %v146 = vadd.f32 0.0, %v145
  %v147 = vpop.f32.mrf.mxu0
  %148 = vmatprep.mubr.f32.mxu0 0.0
  %149 = vmatmul.mubr.f32.gmra.mxu0 %v48
  %v150 = vpop.f32.mrf.mxu0
  %v151 = vadd.f32 0.0, %v150
  %v152 = vpop.f32.mrf.mxu0
  %153 = vmatprep.mubr.f32.mxu0 0.0
  %154 = vmatmul.mubr.f32.gmra.mxu0 %v49
  %v155 = vpop.f32.mrf.mxu0
  %v156 = vadd.f32 0.0, %v155
  %v157 = vpop.f32.mrf.mxu0
  %158 = vmatprep.mubr.f32.mxu0 0.0
  %159 = vmatmul.mubr.f32.gmra.mxu0 %v50
  %v160 = vpop.f32.mrf.mxu0
  %v161 = vadd.f32 0.0, %v160
  %v162 = vpop.f32.mrf.mxu0
  %163 = vmatprep.mubr.f32.mxu0 0.0
  %164 = vmatmul.mubr.f32.gmra.mxu0 %v51
  %v165 = vpop.f32.mrf.mxu0
  %v166 = vadd.f32 0.0, %v165
  %v167 = vpop.f32.mrf.mxu0
  %168 = vmatprep.mubr.f32.mxu0 0.0
  %169 = vmatmul.mubr.f32.gmra.mxu0 %v52
  %v170 = vpop.f32.mrf.mxu0
  %v171 = vadd.f32 0.0, %v170
  %v172 = vpop.f32.mrf.mxu0
  %173 = vmatprep.mubr.f32.mxu0 0.0
  %174 = vmatmul.mubr.f32.gmra.mxu0 %v53
  %v175 = vpop.f32.mrf.mxu0
  %v176 = vadd.f32 0.0, %v175
  %v177 = vpop.f32.mrf.mxu0
  %178 = vmatprep.mubr.f32.mxu0 0.0
  %179 = vmatmul.mubr.f32.gmra.mxu0 %v54
  %v180 = vpop.f32.mrf.mxu0
  %v181 = vadd.f32 0.0, %v180
  %v182 = vpop.f32.mrf.mxu0
  %183 = vmatprep.mubr.f32.mxu0 0.0
  %184 = vmatmul.mubr.f32.gmra.mxu0 %v55
  %v185 = vpop.f32.mrf.mxu0
  %v186 = vadd.f32 0.0, %v185
  %v187 = vpop.f32.mrf.mxu0
  %188 = vmatprep.mubr.f32.mxu0 0.0
  %189 = vmatmul.mubr.f32.gmra.mxu0 %v56
  %v190 = vpop.f32.mrf.mxu0
  %v191 = vadd.f32 0.0, %v190
  %v192 = vpop.f32.mrf.mxu0
  %193 = vmatprep.mubr.f32.mxu0 0.0
  %194 = vmatmul.mubr.f32.gmra.mxu0 %v57
  %v195 = vpop.f32.mrf.mxu0
  %v196 = vadd.f32 0.0, %v195
  %v197 = vpop.f32.mrf.mxu0
  %198 = vmatprep.mubr.f32.mxu0 0.0
  %199 = vmatmul.mubr.f32.gmra.mxu0 %v58
  %v200 = vpop.f32.mrf.mxu0
  %v201 = vadd.f32 0.0, %v200
  %v202 = vpop.f32.mrf.mxu0
  %203 = vmatprep.mubr.f32.mxu0 0.0
  %204 = vmatmul.mubr.f32.gmra.mxu0 %v59
  %v205 = vpop.f32.mrf.mxu0
  %v206 = vadd.f32 0.0, %v205
  %v207 = vpop.f32.mrf.mxu0
  %208 = vmatprep.mubr.f32.mxu0 0.0
  %209 = vmatmul.mubr.f32.gmra.mxu0 %v60
  %v210 = vpop.f32.mrf.mxu0
  %v211 = vadd.f32 0.0, %v210
  %v212 = vpop.f32.mrf.mxu0
  %213 = vmatprep.mubr.f32.mxu0 0.0
  %214 = vmatmul.mubr.f32.gmra.mxu0 %v61
  %v215 = vpop.f32.mrf.mxu0
  %v216 = vadd.f32 0.0, %v215
  %v217 = vpop.f32.mrf.mxu0
  %218 = vmatprep.mubr.f32.mxu0 0.0
  %219 = vmatmul.mubr.f32.gmra.mxu0 %v62
  %v220 = vpop.f32.mrf.mxu0
  %v221 = vadd.f32 0.0, %v220
  %v222 = vpop.f32.mrf.mxu0
  %223 = vdwg.mxu0
  %v224 = vadd.f32 %v31, %v146
  %v225 = vadd.f32 %v32, %v151
  %v226 = vadd.f32 %v33, %v156
  %v227 = vadd.f32 %v34, %v161
  %v228 = vadd.f32 %v35, %v166
  %v229 = vadd.f32 %v36, %v171
  %v230 = vadd.f32 %v37, %v176
  %v231 = vadd.f32 %v38, %v181
  %v232 = vadd.f32 %v39, %v186
  %v233 = vadd.f32 %v40, %v191
  %v234 = vadd.f32 %v41, %v196
  %v235 = vadd.f32 %v42, %v201
  %v236 = vadd.f32 %v43, %v206
  %v237 = vadd.f32 %v44, %v211
  %v238 = vadd.f32 %v45, %v216
  %v239 = vadd.f32 %v46, %v221
  %240 = vst [vmem:[#allocation2] sm:$0xff] %v224
  %241 = vst [vmem:[#allocation2 + $0x8] sm:$0xff] %v225
  %242 = vst [vmem:[#allocation2 + $0x10] sm:$0xff] %v226
  %243 = vst [vmem:[#allocation2 + $0x18] sm:$0xff] %v227
  %244 = vst [vmem:[#allocation2 + $0x20] sm:$0xff] %v228
  %245 = vst [vmem:[#allocation2 + $0x28] sm:$0xff] %v229
  %246 = vst [vmem:[#allocation2 + $0x30] sm:$0xff] %v230
  %247 = vst [vmem:[#allocation2 + $0x38] sm:$0xff] %v231
  %248 = vst [vmem:[#allocation2 + $0x40] sm:$0xff] %v232
  %249 = vst [vmem:[#allocation2 + $0x48] sm:$0xff] %v233
  %250 = vst [vmem:[#allocation2 + $0x50] sm:$0xff] %v234
  %251 = vst [vmem:[#allocation2 + $0x58] sm:$0xff] %v235
  %252 = vst [vmem:[#allocation2 + $0x60] sm:$0xff] %v236
  %253 = vst [vmem:[#allocation2 + $0x68] sm:$0xff] %v237
  %254 = vst [vmem:[#allocation2 + $0x70] sm:$0xff] %v238
  %255 = vst [vmem:[#allocation2 + $0x78] sm:$0xff] %v239
  %v256 = vld [vmem:[#allocation2] sm:$0xff]
  %v257 = vld [vmem:[#allocation2 + $0x8] sm:$0xff]
  %v258 = vld [vmem:[#allocation2 + $0x10] sm:$0xff]
  %v259 = vld [vmem:[#allocation2 + $0x18] sm:$0xff]
  %v260 = vld [vmem:[#allocation2 + $0x20] sm:$0xff]
  %v261 = vld [vmem:[#allocation2 + $0x28] sm:$0xff]
  %v262 = vld [vmem:[#allocation2 + $0x30] sm:$0xff]
  %v263 = vld [vmem:[#allocation2 + $0x38] sm:$0xff]
  %v264 = vld [vmem:[#allocation2 + $0x40] sm:$0xff]
  %v265 = vld [vmem:[#allocation2 + $0x48] sm:$0xff]
  %v266 = vld [vmem:[#allocation2 + $0x50] sm:$0xff]
  %v267 = vld [vmem:[#allocation2 + $0x58] sm:$0xff]
  %v268 = vld [vmem:[#allocation2 + $0x60] sm:$0xff]
  %v269 = vld [vmem:[#allocation2 + $0x68] sm:$0xff]
  %v270 = vld [vmem:[#allocation2 + $0x70] sm:$0xff]
  %v271 = vld [vmem:[#allocation2 + $0x78] sm:$0xff]
  %272 = vst [vmem:[%s2] sm:$0xff] %v256
  %273 = vst [vmem:[%s2 + $0x8] sm:$0xff] %v257
  %274 = vst [vmem:[%s2 + $0x10] sm:$0xff] %v258
  %275 = vst [vmem:[%s2 + $0x18] sm:$0xff] %v259
  %276 = vst [vmem:[%s2 + $0x20] sm:$0xff] %v260
  %277 = vst [vmem:[%s2 + $0x28] sm:$0xff] %v261
  %278 = vst [vmem:[%s2 + $0x30] sm:$0xff] %v262
  %279 = vst [vmem:[%s2 + $0x38] sm:$0xff] %v263
  %280 = vst [vmem:[%s2 + $0x40] sm:$0xff] %v264
  %281 = vst [vmem:[%s2 + $0x48] sm:$0xff] %v265
  %282 = vst [vmem:[%s2 + $0x50] sm:$0xff] %v266
  %283 = vst [vmem:[%s2 + $0x58] sm:$0xff] %v267
  %284 = vst [vmem:[%s2 + $0x60] sm:$0xff] %v268
  %285 = vst [vmem:[%s2 + $0x68] sm:$0xff] %v269
  %286 = vst [vmem:[%s2 + $0x70] sm:$0xff] %v270
  %287 = vst [vmem:[%s2 + $0x78] sm:$0xff] %v271
  // Predicated region
  $region14: #{relevance_propagation_bottleneck.28} parent=0 // pred_check
    _
  $region15: #{relevance_propagation_bottleneck.28} parent=0 // pred_check_branch
    %289 = sbr.rel (0) target = $region17
  $region16: #{relevance_propagation_bottleneck.28} parent=0 // pred_region
    _
  $region17: #{relevance_propagation_bottleneck.28} parent=0 // pred_fallthru
    _
  // Predicated region
  $region18: #{relevance_propagation_bottleneck.28} parent=0 // pred_check
    _
  $region19: #{relevance_propagation_bottleneck.28} parent=0 // pred_check_branch
    %291 = sbr.rel (0) target = $region21
  $region20: #{relevance_propagation_bottleneck.28} parent=0 // pred_region
    _
  $region21: #{relevance_propagation_bottleneck.28} parent=0 // pred_fallthru
    _

// kernel: relevance_propagation_bottleneck.31
$region0: #{relevance_propagation_bottleneck.31}
  #allocation0 [shape = 'u32[]', space=smem, size = 0x4, offset = 0x4, fixed_abs, tag = 'smem constant byte address 0x4 - core index']
  #allocation1 [shape = 'u32[144,128]{1,0:T(1,128)}', space=vmem, size = 0x12000, scoped, tag = 'internal scratch']
  %s0 = inlined_call_operand.vmem [shape: f32[32,128], index: 0, kind: input, shape index: {}]
  %s1 = inlined_call_operand.vmem [shape: f32[32,1], index: 1, kind: input, shape index: {}]
  %s2 = inlined_call_operand.vmem [shape: f32[32,1], index: 2, kind: input, shape index: {}]
  %s3 = inlined_call_operand.vmem [shape: f32[32,128], index: 3, kind: output, shape index: {}]
  %s4 = sld [smem:[#allocation0]]
  $region22: #{relevance_propagation_bottleneck.31} parent=0
    _
  %s6 = ssub.s32 1, %s4
  %s7 = scalar_select 0, %s6, %s4
  // Predicated region
  $region2: #{relevance_propagation_bottleneck.31} parent=0 // pred_check
    _
  $region3: #{relevance_propagation_bottleneck.31} parent=0 // pred_check_branch
    %9 = sbr.rel (0) target = $region5
  $region4: #{relevance_propagation_bottleneck.31} parent=0 // pred_region
    _
  $region5: #{relevance_propagation_bottleneck.31} parent=0 // pred_fallthru
    _
  // Predicated region
  $region6: #{relevance_propagation_bottleneck.31} parent=0 // pred_check
    _
  $region7: #{relevance_propagation_bottleneck.31} parent=0 // pred_check_branch
    %11 = sbr.rel (0) target = $region9
  $region8: #{relevance_propagation_bottleneck.31} parent=0 // pred_region
    _
  $region9: #{relevance_propagation_bottleneck.31} parent=0 // pred_fallthru
    _
  // Predicated region
  $region10: #{relevance_propagation_bottleneck.31} parent=0 // pred_check
    _
  $region11: #{relevance_propagation_bottleneck.31} parent=0 // pred_check_branch
    %13 = sbr.rel (0) target = $region13
  $region12: #{relevance_propagation_bottleneck.31} parent=0 // pred_region
    _
  $region13: #{relevance_propagation_bottleneck.31} parent=0 // pred_fallthru
    _
  %v14 = vld [vmem:[%s0] sm:$0xff]
  %v15 = vld [vmem:[%s0 + $0x8] sm:$0xff]
  %v16 = vld [vmem:[%s0 + $0x10] sm:$0xff]
  %v17 = vld [vmem:[%s0 + $0x18] sm:$0xff]
  %v18 = vld [vmem:[%s1] sm:$0xff]
  %v19 = vld [vmem:[%s1 + $0x8] sm:$0xff]
  %v20 = vld [vmem:[%s1 + $0x10] sm:$0xff]
  %v21 = vld [vmem:[%s1 + $0x18] sm:$0xff]
  %23 = vset.pattern.permute.xlu0 0
  %24 = vperm.xlu0 %23, %v18
  %v25 = vpop.permute.xlu0 %24
  %28 = vset.pattern.permute.xlu0 0
  %29 = vperm.xlu0 %28, %v19
  %v30 = vpop.permute.xlu0 %29
  %33 = vset.pattern.permute.xlu0 0
  %34 = vperm.xlu0 %33, %v20
  %v35 = vpop.permute.xlu0 %34
  %38 = vset.pattern.permute.xlu0 0
  %39 = vperm.xlu0 %38, %v21
  %v40 = vpop.permute.xlu0 %39
  %v42 = vmul.f32 %v14, %v25
  %v43 = vmul.f32 %v15, %v30
  %v44 = vmul.f32 %v16, %v35
  %v45 = vmul.f32 %v17, %v40
  %v46 = vld [vmem:[%s2] sm:$0xff]
  %v47 = vld [vmem:[%s2 + $0x8] sm:$0xff]
  %v48 = vld [vmem:[%s2 + $0x10] sm:$0xff]
  %v49 = vld [vmem:[%s2 + $0x18] sm:$0xff]
  %51 = vset.pattern.permute.xlu0 0
  %52 = vperm.xlu0 %51, %v46
  %v53 = vpop.permute.xlu0 %52
  %56 = vset.pattern.permute.xlu0 0
  %57 = vperm.xlu0 %56, %v47
  %v58 = vpop.permute.xlu0 %57
  %61 = vset.pattern.permute.xlu0 0
  %62 = vperm.xlu0 %61, %v48
  %v63 = vpop.permute.xlu0 %62
  %66 = vset.pattern.permute.xlu0 0
  %67 = vperm.xlu0 %66, %v49
  %v68 = vpop.permute.xlu0 %67
  %v70 = vadd.f32 %v42, %v53
  %v71 = vadd.f32 %v43, %v58
  %v72 = vadd.f32 %v44, %v63
  %v73 = vadd.f32 %v45, %v68
  %74 = vst [vmem:[%s3] sm:$0xff] %v70
  %75 = vst [vmem:[%s3 + $0x8] sm:$0xff] %v71
  %76 = vst [vmem:[%s3 + $0x10] sm:$0xff] %v72
  %77 = vst [vmem:[%s3 + $0x18] sm:$0xff] %v73
  // Predicated region
  $region14: #{relevance_propagation_bottleneck.31} parent=0 // pred_check
    _
  $region15: #{relevance_propagation_bottleneck.31} parent=0 // pred_check_branch
    %79 = sbr.rel (0) target = $region17
  $region16: #{relevance_propagation_bottleneck.31} parent=0 // pred_region
    _
  $region17: #{relevance_propagation_bottleneck.31} parent=0 // pred_fallthru
    _
  // Predicated region
  $region18: #{relevance_propagation_bottleneck.31} parent=0 // pred_check
    _
  $region19: #{relevance_propagation_bottleneck.31} parent=0 // pred_check_branch
    %81 = sbr.rel (0) target = $region21
  $region20: #{relevance_propagation_bottleneck.31} parent=0 // pred_region
    _
  $region21: #{relevance_propagation_bottleneck.31} parent=0 // pred_fallthru
    _

// kernel: relevance_propagation_bottleneck.34
$region0: #{relevance_propagation_bottleneck.34}
  #allocation0 [shape = 'u32[]', space=smem, size = 0x4, offset = 0x4, fixed_abs, tag = 'smem constant byte address 0x4 - core index']
  #allocation1 [shape = 'u32[144,128]{1,0:T(1,128)}', space=vmem, size = 0x12000, scoped, tag = 'internal scratch']
  %s0 = inlined_call_operand.vmem [shape: f32[8,512], index: 0, kind: input, shape index: {}]
  %s1 = inlined_call_operand.vmem [shape: f32[8,512], index: 1, kind: input, shape index: {}]
  %s2 = inlined_call_operand.vmem [shape: f32[8,512], index: 2, kind: input, shape index: {}]
  %s3 = inlined_call_operand.vmem [shape: f32[8,512], index: 3, kind: output, shape index: {0}]
  %s4 = inlined_call_operand.vmem [shape: f32[8,512], index: 4, kind: output, shape index: {1}]
  %5 = xla_tuple %s3, %s4
  %s6 = sld [smem:[#allocation0]]
  $region30: #{relevance_propagation_bottleneck.34} parent=0
    _
  %s8 = ssub.s32 1, %s6
  %s9 = scalar_select 0, %s8, %s6
  // Predicated region
  $region2: #{relevance_propagation_bottleneck.34} parent=0 // pred_check
    _
  $region3: #{relevance_propagation_bottleneck.34} parent=0 // pred_check_branch
    %11 = sbr.rel (0) target = $region5
  $region4: #{relevance_propagation_bottleneck.34} parent=0 // pred_region
    _
  $region5: #{relevance_propagation_bottleneck.34} parent=0 // pred_fallthru
    _
  // Predicated region
  $region6: #{relevance_propagation_bottleneck.34} parent=0 // pred_check
    _
  $region7: #{relevance_propagation_bottleneck.34} parent=0 // pred_check_branch
    %13 = sbr.rel (0) target = $region9
  $region8: #{relevance_propagation_bottleneck.34} parent=0 // pred_region
    _
  $region9: #{relevance_propagation_bottleneck.34} parent=0 // pred_fallthru
    _
  // Predicated region
  $region10: #{relevance_propagation_bottleneck.34} parent=0 // pred_check
    _
  $region11: #{relevance_propagation_bottleneck.34} parent=0 // pred_check_branch
    %15 = sbr.rel (0) target = $region13
  $region12: #{relevance_propagation_bottleneck.34} parent=0 // pred_region
    _
  $region13: #{relevance_propagation_bottleneck.34} parent=0 // pred_fallthru
    _
  %v16 = vld [vmem:[%s0] sm:$0xff]
  %v17 = vld [vmem:[%s0 + $0x8] sm:$0xff]
  %v18 = vld [vmem:[%s0 + $0x10] sm:$0xff]
  %v19 = vld [vmem:[%s0 + $0x18] sm:$0xff]
  %v20 = vand.u32 2147483647, %v16
  %v21 = vand.u32 2147483647, %v17
  %v22 = vand.u32 2147483647, %v18
  %v23 = vand.u32 2147483647, %v19
  %v24 = vld [vmem:[%s1] sm:$0xff]
  %v25 = vld [vmem:[%s1 + $0x8] sm:$0xff]
  %v26 = vld [vmem:[%s1 + $0x10] sm:$0xff]
  %v27 = vld [vmem:[%s1 + $0x18] sm:$0xff]
  %v28 = vand.u32 2147483647, %v24
  %v29 = vand.u32 2147483647, %v25
  %v30 = vand.u32 2147483647, %v26
  %v31 = vand.u32 2147483647, %v27
  %v32 = vadd.f32 %v20, %v28
  %v33 = vadd.f32 %v21, %v29
  %v34 = vadd.f32 %v22, %v30
  %v35 = vadd.f32 %v23, %v31
  %v36 = vrcp.pop %v32
  %v37 = vmul.f32 %v20, %v36
  %v38 = vrcp.pop %v33
  %v39 = vmul.f32 %v21, %v38
  %v40 = vrcp.pop %v34
  %v41 = vmul.f32 %v22, %v40
  %v42 = vrcp.pop %v35
  %v43 = vmul.f32 %v23, %v42
  %v44 = vld [vmem:[%s2] sm:$0xff]
  %v45 = vld [vmem:[%s2 + $0x8] sm:$0xff]
  %v46 = vld [vmem:[%s2 + $0x10] sm:$0xff]
  %v47 = vld [vmem:[%s2 + $0x18] sm:$0xff]
  %v48 = vmul.f32 %v37, %v44
  %v49 = vmul.f32 %v39, %v45
  %v50 = vmul.f32 %v41, %v46
  %v51 = vmul.f32 %v43, %v47
  %52 = vst [vmem:[%s3] sm:$0xff] %v48
  %53 = vst [vmem:[%s3 + $0x8] sm:$0xff] %v49
  %54 = vst [vmem:[%s3 + $0x10] sm:$0xff] %v50
  %55 = vst [vmem:[%s3 + $0x18] sm:$0xff] %v51
  %v56 = vsub.f32 1.0, %v37
  %v57 = vsub.f32 1.0, %v39
  %v58 = vsub.f32 1.0, %v41
  %v59 = vsub.f32 1.0, %v43
  %v60 = vmul.f32 %v56, %v44
  %v61 = vmul.f32 %v57, %v45
  %v62 = vmul.f32 %v58, %v46
  %v63 = vmul.f32 %v59, %v47
  %64 = vst [vmem:[%s4] sm:$0xff] %v60
  %65 = vst [vmem:[%s4 + $0x8] sm:$0xff] %v61
  %66 = vst [vmem:[%s4 + $0x10] sm:$0xff] %v62
  %67 = vst [vmem:[%s4 + $0x18] sm:$0xff] %v63
  // Predicated region
  $region14: #{relevance_propagation_bottleneck.34} parent=0 // pred_check
    _
  $region15: #{relevance_propagation_bottleneck.34} parent=0 // pred_check_branch
    %69 = sbr.rel (0) target = $region17
  $region16: #{relevance_propagation_bottleneck.34} parent=0 // pred_region
    _
  $region17: #{relevance_propagation_bottleneck.34} parent=0 // pred_fallthru
    _
  // Predicated region
  $region18: #{relevance_propagation_bottleneck.34} parent=0 // pred_check
    _
  $region19: #{relevance_propagation_bottleneck.34} parent=0 // pred_check_branch
    %71 = sbr.rel (0) target = $region21
  $region20: #{relevance_propagation_bottleneck.34} parent=0 // pred_region
    _
  $region21: #{relevance_propagation_bottleneck.34} parent=0 // pred_fallthru
    _
  // Predicated region
  $region22: #{relevance_propagation_bottleneck.34} parent=0 // pred_check
    _
  $region23: #{relevance_propagation_bottleneck.34} parent=0 // pred_check_branch
    %73 = sbr.rel (0) target = $region25
  $region24: #{relevance_propagation_bottleneck.34} parent=0 // pred_region
    _
  $region25: #{relevance_propagation_bottleneck.34} parent=0 // pred_fallthru
    _
  // Predicated region
  $region26: #{relevance_propagation_bottleneck.34} parent=0 // pred_check
    _
  $region27: #{relevance_propagation_bottleneck.34} parent=0 // pred_check_branch
    %75 = sbr.rel (0) target = $region29
  $region28: #{relevance_propagation_bottleneck.34} parent=0 // pred_region
    _
  $region29: #{relevance_propagation_bottleneck.34} parent=0 // pred_fallthru
    _

// kernel: relevance_propagation_bottleneck.36
$region0: #{relevance_propagation_bottleneck.36}
  #allocation0 [shape = 'u32[]', space=smem, size = 0x4, offset = 0x4, fixed_abs, tag = 'smem constant byte address 0x4 - core index']
  #allocation1 [shape = 'u32[144,128]{1,0:T(1,128)}', space=vmem, size = 0x12000, scoped, tag = 'internal scratch']
  %s0 = inlined_call_operand.vmem [shape: f32[8,512], index: 0, kind: input, shape index: {}]
  %s1 = inlined_call_operand.vmem [shape: f32[8,512], index: 1, kind: input, shape index: {}]
  %s2 = inlined_call_operand.vmem [shape: f32[8,512], index: 2, kind: output, shape index: {}]
  %s3 = sld [smem:[#allocation0]]
  $region18: #{relevance_propagation_bottleneck.36} parent=0
    _
  %s5 = ssub.s32 1, %s3
  %s6 = scalar_select 0, %s5, %s3
  // Predicated region
  $region2: #{relevance_propagation_bottleneck.36} parent=0 // pred_check
    _
  $region3: #{relevance_propagation_bottleneck.36} parent=0 // pred_check_branch
    %8 = sbr.rel (0) target = $region5
  $region4: #{relevance_propagation_bottleneck.36} parent=0 // pred_region
    _
  $region5: #{relevance_propagation_bottleneck.36} parent=0 // pred_fallthru
    _
  // Predicated region
  $region6: #{relevance_propagation_bottleneck.36} parent=0 // pred_check
    _
  $region7: #{relevance_propagation_bottleneck.36} parent=0 // pred_check_branch
    %10 = sbr.rel (0) target = $region9
  $region8: #{relevance_propagation_bottleneck.36} parent=0 // pred_region
    _
  $region9: #{relevance_propagation_bottleneck.36} parent=0 // pred_fallthru
    _
  %v11 = vld [vmem:[%s0] sm:$0xff]
  %v12 = vld [vmem:[%s0 + $0x8] sm:$0xff]
  %v13 = vld [vmem:[%s0 + $0x10] sm:$0xff]
  %v14 = vld [vmem:[%s0 + $0x18] sm:$0xff]
  %v15 = vld [vmem:[%s1] sm:$0xff]
  %v16 = vld [vmem:[%s1 + $0x8] sm:$0xff]
  %v17 = vld [vmem:[%s1 + $0x10] sm:$0xff]
  %v18 = vld [vmem:[%s1 + $0x18] sm:$0xff]
  %v19 = vadd.f32 %v15, 1e-05
  %v20 = vadd.f32 %v16, 1e-05
  %v21 = vadd.f32 %v17, 1e-05
  %v22 = vadd.f32 %v18, 1e-05
  %v23 = vrcp.pop %v19
  %v24 = vmul.f32 %v11, %v23
  %v25 = vrcp.pop %v20
  %v26 = vmul.f32 %v12, %v25
  %v27 = vrcp.pop %v21
  %v28 = vmul.f32 %v13, %v27
  %v29 = vrcp.pop %v22
  %v30 = vmul.f32 %v14, %v29
  %31 = vst [vmem:[%s2] sm:$0xff] %v24
  %32 = vst [vmem:[%s2 + $0x8] sm:$0xff] %v26
  %33 = vst [vmem:[%s2 + $0x10] sm:$0xff] %v28
  %34 = vst [vmem:[%s2 + $0x18] sm:$0xff] %v30
  // Predicated region
  $region10: #{relevance_propagation_bottleneck.36} parent=0 // pred_check
    _
  $region11: #{relevance_propagation_bottleneck.36} parent=0 // pred_check_branch
    %36 = sbr.rel (0) target = $region13
  $region12: #{relevance_propagation_bottleneck.36} parent=0 // pred_region
    _
  $region13: #{relevance_propagation_bottleneck.36} parent=0 // pred_fallthru
    _
  // Predicated region
  $region14: #{relevance_propagation_bottleneck.36} parent=0 // pred_check
    _
  $region15: #{relevance_propagation_bottleneck.36} parent=0 // pred_check_branch
    %38 = sbr.rel (0) target = $region17
  $region16: #{relevance_propagation_bottleneck.36} parent=0 // pred_region
    _
  $region17: #{relevance_propagation_bottleneck.36} parent=0 // pred_fallthru
    _

// kernel: relevance_propagation_bottleneck.38
$region0: #{relevance_propagation_bottleneck.38}
  #allocation0 [shape = 'u32[]', space=smem, size = 0x4, offset = 0x4, fixed_abs, tag = 'smem constant byte address 0x4 - core index']
  #allocation1 [shape = 'u32[144,128]{1,0:T(1,128)}', space=vmem, size = 0x12000, scoped, tag = 'internal scratch']
  %s0 = inlined_call_operand.vmem [shape: f32[8,512], index: 0, kind: input, shape index: {}]
  %s1 = inlined_call_operand.vmem [shape: f32[8,512], index: 1, kind: input, shape index: {}]
  %s2 = inlined_call_operand.vmem [shape: f32[8,512], index: 2, kind: output, shape index: {}]
  %s3 = sld [smem:[#allocation0]]
  $region18: #{relevance_propagation_bottleneck.38} parent=0
    _
  %s5 = ssub.s32 1, %s3
  %s6 = scalar_select 0, %s5, %s3
  // Predicated region
  $region2: #{relevance_propagation_bottleneck.38} parent=0 // pred_check
    _
  $region3: #{relevance_propagation_bottleneck.38} parent=0 // pred_check_branch
    %8 = sbr.rel (0) target = $region5
  $region4: #{relevance_propagation_bottleneck.38} parent=0 // pred_region
    _
  $region5: #{relevance_propagation_bottleneck.38} parent=0 // pred_fallthru
    _
  // Predicated region
  $region6: #{relevance_propagation_bottleneck.38} parent=0 // pred_check
    _
  $region7: #{relevance_propagation_bottleneck.38} parent=0 // pred_check_branch
    %10 = sbr.rel (0) target = $region9
  $region8: #{relevance_propagation_bottleneck.38} parent=0 // pred_region
    _
  $region9: #{relevance_propagation_bottleneck.38} parent=0 // pred_fallthru
    _
  %v11 = vld [vmem:[%s0] sm:$0xff]
  %v12 = vld [vmem:[%s0 + $0x8] sm:$0xff]
  %v13 = vld [vmem:[%s0 + $0x10] sm:$0xff]
  %v14 = vld [vmem:[%s0 + $0x18] sm:$0xff]
  %v15 = vld [vmem:[%s1] sm:$0xff]
  %v16 = vld [vmem:[%s1 + $0x8] sm:$0xff]
  %v17 = vld [vmem:[%s1 + $0x10] sm:$0xff]
  %v18 = vld [vmem:[%s1 + $0x18] sm:$0xff]
  %v19 = vmul.f32 %v11, %v15
  %v20 = vmul.f32 %v12, %v16
  %v21 = vmul.f32 %v13, %v17
  %v22 = vmul.f32 %v14, %v18
  %23 = vst [vmem:[%s2] sm:$0xff] %v19
  %24 = vst [vmem:[%s2 + $0x8] sm:$0xff] %v20
  %25 = vst [vmem:[%s2 + $0x10] sm:$0xff] %v21
  %26 = vst [vmem:[%s2 + $0x18] sm:$0xff] %v22
  // Predicated region
  $region10: #{relevance_propagation_bottleneck.38} parent=0 // pred_check
    _
  $region11: #{relevance_propagation_bottleneck.38} parent=0 // pred_check_branch
    %28 = sbr.rel (0) target = $region13
  $region12: #{relevance_propagation_bottleneck.38} parent=0 // pred_region
    _
  $region13: #{relevance_propagation_bottleneck.38} parent=0 // pred_fallthru
    _
  // Predicated region
  $region14: #{relevance_propagation_bottleneck.38} parent=0 // pred_check
    _
  $region15: #{relevance_propagation_bottleneck.38} parent=0 // pred_check_branch
    %30 = sbr.rel (0) target = $region17
  $region16: #{relevance_propagation_bottleneck.38} parent=0 // pred_region
    _
  $region17: #{relevance_propagation_bottleneck.38} parent=0 // pred_fallthru
    _

// kernel: relevance_propagation_bottleneck.51
$region0: #{relevance_propagation_bottleneck.51}
  #allocation0 [shape = 'u32[]', space=smem, size = 0x4, offset = 0x4, fixed_abs, tag = 'smem constant byte address 0x4 - core index']
  #allocation1 [shape = 'u32[144,128]{1,0:T(1,128)}', space=vmem, size = 0x12000, scoped, tag = 'internal scratch']
  %s0 = inlined_call_operand.vmem [shape: f32[8,512], index: 0, kind: input, shape index: {}]
  %s1 = inlined_call_operand.vmem [shape: f32[8,512], index: 1, kind: input, shape index: {}]
  %s2 = inlined_call_operand.vmem [shape: f32[8,512], index: 2, kind: output, shape index: {}]
  %s3 = sld [smem:[#allocation0]]
  $region18: #{relevance_propagation_bottleneck.51} parent=0
    _
  %s5 = ssub.s32 1, %s3
  %s6 = scalar_select 0, %s5, %s3
  // Predicated region
  $region2: #{relevance_propagation_bottleneck.51} parent=0 // pred_check
    _
  $region3: #{relevance_propagation_bottleneck.51} parent=0 // pred_check_branch
    %8 = sbr.rel (0) target = $region5
  $region4: #{relevance_propagation_bottleneck.51} parent=0 // pred_region
    _
  $region5: #{relevance_propagation_bottleneck.51} parent=0 // pred_fallthru
    _
  // Predicated region
  $region6: #{relevance_propagation_bottleneck.51} parent=0 // pred_check
    _
  $region7: #{relevance_propagation_bottleneck.51} parent=0 // pred_check_branch
    %10 = sbr.rel (0) target = $region9
  $region8: #{relevance_propagation_bottleneck.51} parent=0 // pred_region
    _
  $region9: #{relevance_propagation_bottleneck.51} parent=0 // pred_fallthru
    _
  %v11 = vld [vmem:[%s0] sm:$0xff]
  %v12 = vld [vmem:[%s0 + $0x8] sm:$0xff]
  %v13 = vld [vmem:[%s0 + $0x10] sm:$0xff]
  %v14 = vld [vmem:[%s0 + $0x18] sm:$0xff]
  %v15 = vld [vmem:[%s1] sm:$0xff]
  %v16 = vld [vmem:[%s1 + $0x8] sm:$0xff]
  %v17 = vld [vmem:[%s1 + $0x10] sm:$0xff]
  %v18 = vld [vmem:[%s1 + $0x18] sm:$0xff]
  %v19 = vadd.f32 %v11, %v15
  %v20 = vadd.f32 %v12, %v16
  %v21 = vadd.f32 %v13, %v17
  %v22 = vadd.f32 %v14, %v18
  %23 = vst [vmem:[%s2] sm:$0xff] %v19
  %24 = vst [vmem:[%s2 + $0x8] sm:$0xff] %v20
  %25 = vst [vmem:[%s2 + $0x10] sm:$0xff] %v21
  %26 = vst [vmem:[%s2 + $0x18] sm:$0xff] %v22
  // Predicated region
  $region10: #{relevance_propagation_bottleneck.51} parent=0 // pred_check
    _
  $region11: #{relevance_propagation_bottleneck.51} parent=0 // pred_check_branch
    %28 = sbr.rel (0) target = $region13
  $region12: #{relevance_propagation_bottleneck.51} parent=0 // pred_region
    _
  $region13: #{relevance_propagation_bottleneck.51} parent=0 // pred_fallthru
    _
  // Predicated region
  $region14: #{relevance_propagation_bottleneck.51} parent=0 // pred_check
    _
  $region15: #{relevance_propagation_bottleneck.51} parent=0 // pred_check_branch
    %30 = sbr.rel (0) target = $region17
  $region16: #{relevance_propagation_bottleneck.51} parent=0 // pred_region
    _
  $region17: #{relevance_propagation_bottleneck.51} parent=0 // pred_fallthru
    _

</llo_original>
